<compile_context>
chip_gen: v7x
topology: tpu7x:2x2x1
jax: 0.10.0
libtpu: 0.0.40
codegen_flags: <defaults>
</compile_context>

<pallas_src>
import math

import jax
import jax.numpy as jnp
from jax import lax
from jax.experimental import pallas as pl
from jax.experimental.pallas import tpu as pltpu


# -----------------------------------------------------------------------------
# Fused Pallas kernel: 3x3 "same" conv (deep-K im2col matmul) + BN + ReLU
# -----------------------------------------------------------------------------
def _conv3x3_bn_relu_kernel(x_ref, w_ref, s_ref, b_ref, o_ref, xcol_ref):
    # x_ref   : (1, H+2, W+2, Cin) bf16  padded NHWC input (resident per batch)
    # w_ref   : (tn, 9*Cin)        bf16  weights, K ordered as (kh, kw, cin)
    # s_ref   : (tn, 1)            f32   folded BN scale
    # b_ref   : (tn, 1)            f32   folded BN bias (+ conv bias)
    # o_ref   : (1, tn, H*W)       f32   NCHW-flattened, lane-dense output tile
    # xcol_ref: (H*W, 9*Cin)       bf16  VMEM im2col slab (persists across grid)
    _, hp, wp, cin = x_ref.shape
    h, w = hp - 2, wp - 2
    hw = h * w

    # Build the im2col slab once per batch element; reuse it for all Cout tiles
    # (the j grid axis is "arbitrary", so j == 0 always runs first per core).
    @pl.when(pl.program_id(1) == 0)
    def _():
        xv = x_ref[0]                                   # (H+2, W+2, Cin) in VMEM
        for kh in range(3):
            for kw in range(3):
                t = kh * 3 + kw
                xcol_ref[:, t * cin:(t + 1) * cin] = (
                    xv[kh:kh + h, kw:kw + w, :].reshape(hw, cin))

    # Single deep-K MXU matmul: (tn, 9Cin) . (H*W, 9Cin)^T -> (tn, H*W),
    # expressed directly with dot_general contracting dim 1 of both operands
    # (no explicit transpose op), with an f32 accumulator.
    acc = lax.dot_general(
        w_ref[...], xcol_ref[...],
        dimension_numbers=(((1,), (1,)), ((), ())),
        preferred_element_type=jnp.float32)

    # Fused epilogue: folded BatchNorm scale/bias + ReLU; lane-dense store.
    # TODO(synk): at production H*W / tn sizes, tile H inside the kernel (or
    # accumulate into a VMEM scratch) to bound f32 accumulator vreg pressure.
    y = jnp.maximum(acc * s_ref[...] + b_ref[...], 0.0)
    o_ref[0] = y.astype(o_ref.dtype)


def _vmem_limit_bytes():
    # v5e/v6e have 128 MiB of physical VMEM, v7x only 64 MiB; keep headroom
    # below the physical capacity instead of hard-coding a v7x-shaped cap.
    try:
        cap = int(pltpu.get_tpu_info().vmem_capacity_bytes)
    except Exception:
        cap = 64 * 1024 * 1024
    return min((cap * 3) // 4, 100 * 1024 * 1024)


_VMEM_LIMIT = _vmem_limit_bytes()


def conv_bn_relu_forward(x, conv_w, conv_b, gamma, beta,
                         running_mean, running_var, eps=1e-5):
    """x: [N, Cin, H, W] (NCHW, f32), conv_w: [Cout, Cin, 3, 3] (OIHW).

    Returns relu(batchnorm(conv2d(x, conv_w) + conv_b)) as [N, Cout, H, W].
    """
    n, cin, h, w = x.shape
    cout = conv_w.shape[0]
    hw = h * w

    # Fold BN running stats and the conv bias into per-channel scale / bias.
    scale = gamma / jnp.sqrt(running_var + eps)
    bias = beta + scale * (conv_b - running_mean)
    s2 = scale.reshape(cout, 1).astype(jnp.float32)
    b2 = bias.reshape(cout, 1).astype(jnp.float32)

    # NCHW -> padded NHWC bf16 (single fused XLA pass: transpose + cast + pad).
    # TODO(synk): fold this remaining activation HBM round trip into the kernel
    # by reading NCHW f32 directly and doing the layout change in VMEM.
    x_pad = jnp.pad(jnp.transpose(x, (0, 2, 3, 1)).astype(jnp.bfloat16),
                    ((0, 0), (1, 1), (1, 1), (0, 0)))

    # OIHW -> (Cout, 9*Cin) with K ordered as (kh, kw, cin), matching the slab.
    w2 = jnp.transpose(conv_w, (0, 2, 3, 1)).reshape(cout, 9 * cin)
    w2 = w2.astype(jnp.bfloat16)

    # Cout tile: 128 everywhere (v5e MXUs are 128-wide, keeps v7x VMEM small);
    # otherwise the full (unpadded) Cout so there is no wrapper pad/slice.
    tn = 128 if cout % 128 == 0 else cout

    # TODO(synk): large H*W would need an H-tile grid axis with a halo (also
    # improves pipeline occupancy on tiny grids); not needed at these sizes.
    out = pl.pallas_call(
        _conv3x3_bn_relu_kernel,
        out_shape=jax.ShapeDtypeStruct((n, cout, hw), jnp.float32),
        grid_spec=pltpu.PrefetchScalarGridSpec(
            num_scalar_prefetch=0,
            grid=(n, cout // tn),
            in_specs=[
                # Padded activations: one DMA per batch element, resident over j.
                pl.BlockSpec((1, h + 2, w + 2, cin), lambda i, j: (i, 0, 0, 0)),
                # Weights / scale / bias: small resident blocks per Cout tile.
                pl.BlockSpec((tn, 9 * cin), lambda i, j: (j, 0)),
                pl.BlockSpec((tn, 1), lambda i, j: (j, 0)),
                pl.BlockSpec((tn, 1), lambda i, j: (j, 0)),
            ],
            out_specs=pl.BlockSpec((1, tn, hw), lambda i, j: (i, j, 0)),
            scratch_shapes=[pltpu.VMEM((hw, 9 * cin), jnp.bfloat16)],
        ),
        compiler_params=pltpu.CompilerParams(
            # j must be "arbitrary": the im2col slab is built at j == 0 and
            # reused by later j steps, so j cannot be megacore-sharded.
            dimension_semantics=("parallel", "arbitrary"),
            vmem_limit_bytes=_VMEM_LIMIT,
        ),
    )(x_pad, w2, s2, b2)

    # Free metadata reshape: (N, Cout, H*W) -> (N, Cout, H, W).
    return out.reshape(n, cout, h, w)


# -----------------------------------------------------------------------------
# Self-contained test
# -----------------------------------------------------------------------------
if __name__ == "__main__":
    key = jax.random.PRNGKey(0)
    keys = jax.random.split(key, 8)

    N, CIN, COUT, H, W = 2, 16, 32, 16, 16

    x = jax.random.normal(keys[0], (N, CIN, H, W), jnp.float32)
    conv_w = jax.random.normal(keys[1], (COUT, CIN, 3, 3), jnp.float32) \
        * math.sqrt(2.0 / (9 * CIN))
    conv_b = 0.01 * jax.random.normal(keys[2], (COUT,), jnp.float32)
    gamma = 1.0 + 0.1 * jax.random.normal(keys[3], (COUT,), jnp.float32)
    beta = 0.1 * jax.random.normal(keys[4], (COUT,), jnp.float32)
    running_mean = 0.1 * jax.random.normal(keys[5], (COUT,), jnp.float32)
    running_var = 0.5 + jax.random.uniform(keys[6], (COUT,), jnp.float32)

    fwd = jax.jit(conv_bn_relu_forward)
    out = fwd(x, conv_w, conv_b, gamma, beta, running_mean, running_var)
    out = jax.block_until_ready(out)

    assert out.shape == (N, COUT, H, W), out.shape
    assert bool(jnp.all(jnp.isfinite(out)))
    assert bool(jnp.all(out >= 0.0))  # ReLU output

    # Numerical check against an f32 XLA reference (bf16 MXU inputs -> loose tol).
    eps = 1e-5
    ref = jax.lax.conv_general_dilated(
        x, conv_w, window_strides=(1, 1), padding=((1, 1), (1, 1)),
        dimension_numbers=("NCHW", "OIHW", "NCHW"))
    ref = ref + conv_b.reshape(1, -1, 1, 1)
    ref = (gamma.reshape(1, -1, 1, 1)
           * (ref - running_mean.reshape(1, -1, 1, 1))
           / jnp.sqrt(running_var.reshape(1, -1, 1, 1) + eps)
           + beta.reshape(1, -1, 1, 1))
    ref = jnp.maximum(ref, 0.0)
    rel_err = jnp.max(jnp.abs(out - ref)) / (jnp.max(jnp.abs(ref)) + 1e-6)
    assert float(rel_err) < 5e-2, float(rel_err)

    print("KERNEL_OK")
</pallas_src>

<mosaic_0001>
module attributes {stable_mosaic.version = 11 : i64} {
  func.func @_conv3x3_bn_relu_kernel(%arg0: i32, %arg1: i32, %arg2: memref<1x18x18x16xbf16, #tpu.memory_space<vmem>>, %arg3: memref<32x144xbf16, #tpu.memory_space<vmem>>, %arg4: memref<32x1xf32, #tpu.memory_space<vmem>>, %arg5: memref<32x1xf32, #tpu.memory_space<vmem>>, %arg6: memref<1x32x256xf32, #tpu.memory_space<vmem>>, %arg7: memref<256x144xbf16, #tpu.memory_space<vmem>>) attributes {dimension_semantics = [#tpu.dimension_semantics<parallel>, #tpu.dimension_semantics<arbitrary>], iteration_bounds = array<i64: 2, 1>, scalar_prefetch = 0 : i64, scratch_operands = 1 : i64, tpu.core_type = #tpu.core_type<tc>, window_params = [{transform_indices = @transform_0, window_bounds = array<i64: 1, 18, 18, 16>}, {transform_indices = @transform_1, window_bounds = array<i64: 32, 144>}, {transform_indices = @transform_2, window_bounds = array<i64: 32, 1>}, {transform_indices = @transform_3, window_bounds = array<i64: 32, 1>}, {transform_indices = @transform_4, window_bounds = array<i64: 1, 32, 256>}]} {
    %c0_i32 = arith.constant 0 : i32
    %0 = arith.cmpi eq, %arg1, %c0_i32 : i32
    %1 = arith.extui %0 : i1 to i32
    %c0_i32_0 = arith.constant 0 : i32
    %2 = arith.cmpi ne, %1, %c0_i32_0 : i32
    scf.if %2 {
      %c0_12 = arith.constant 0 : index
      %c0_13 = arith.constant 0 : index
      %c0_14 = arith.constant 0 : index
      %c0_15 = arith.constant 0 : index
      %17 = vector.load %arg2[%c0_12, %c0_13, %c0_14, %c0_15] : memref<1x18x18x16xbf16, #tpu.memory_space<vmem>>, vector<1x18x18x16xbf16>
      %18 = vector.shape_cast %17 : vector<1x18x18x16xbf16> to vector<18x18x16xbf16>
      %19 = vector.extract_strided_slice %18 {offsets = [0, 0, 0], sizes = [16, 16, 16], strides = [1, 1, 1]} : vector<18x18x16xbf16> to vector<16x16x16xbf16>
      %20 = vector.shape_cast %19 : vector<16x16x16xbf16> to vector<256x16xbf16>
      %c0_16 = arith.constant 0 : index
      %c0_17 = arith.constant 0 : index
      %21 = vector.load %arg7[%c0_16, %c0_17] : memref<256x144xbf16, #tpu.memory_space<vmem>>, vector<256x16xbf16>
      tpu.vector_store %arg7[%c0_16, %c0_17], %20 {strides = array<i32>} : memref<256x144xbf16, #tpu.memory_space<vmem>>, vector<256x16xbf16>,
      %22 = vector.extract_strided_slice %18 {offsets = [0, 1, 0], sizes = [16, 16, 16], strides = [1, 1, 1]} : vector<18x18x16xbf16> to vector<16x16x16xbf16>
      %23 = vector.shape_cast %22 : vector<16x16x16xbf16> to vector<256x16xbf16>
      %c0_18 = arith.constant 0 : index
      %c16 = arith.constant 16 : index
      %24 = vector.load %arg7[%c0_18, %c16] : memref<256x144xbf16, #tpu.memory_space<vmem>>, vector<256x16xbf16>
      tpu.vector_store %arg7[%c0_18, %c16], %23 {strides = array<i32>} : memref<256x144xbf16, #tpu.memory_space<vmem>>, vector<256x16xbf16>,
      %25 = vector.extract_strided_slice %18 {offsets = [0, 2, 0], sizes = [16, 16, 16], strides = [1, 1, 1]} : vector<18x18x16xbf16> to vector<16x16x16xbf16>
      %26 = vector.shape_cast %25 : vector<16x16x16xbf16> to vector<256x16xbf16>
      %c0_19 = arith.constant 0 : index
      %c32 = arith.constant 32 : index
      %27 = vector.load %arg7[%c0_19, %c32] : memref<256x144xbf16, #tpu.memory_space<vmem>>, vector<256x16xbf16>
      tpu.vector_store %arg7[%c0_19, %c32], %26 {strides = array<i32>} : memref<256x144xbf16, #tpu.memory_space<vmem>>, vector<256x16xbf16>,
      %28 = vector.extract_strided_slice %18 {offsets = [1, 0, 0], sizes = [16, 16, 16], strides = [1, 1, 1]} : vector<18x18x16xbf16> to vector<16x16x16xbf16>
      %29 = vector.shape_cast %28 : vector<16x16x16xbf16> to vector<256x16xbf16>
      %c0_20 = arith.constant 0 : index
      %c48 = arith.constant 48 : index
      %30 = vector.load %arg7[%c0_20, %c48] : memref<256x144xbf16, #tpu.memory_space<vmem>>, vector<256x16xbf16>
      tpu.vector_store %arg7[%c0_20, %c48], %29 {strides = array<i32>} : memref<256x144xbf16, #tpu.memory_space<vmem>>, vector<256x16xbf16>,
      %31 = vector.extract_strided_slice %18 {offsets = [1, 1, 0], sizes = [16, 16, 16], strides = [1, 1, 1]} : vector<18x18x16xbf16> to vector<16x16x16xbf16>
      %32 = vector.shape_cast %31 : vector<16x16x16xbf16> to vector<256x16xbf16>
      %c0_21 = arith.constant 0 : index
      %c64 = arith.constant 64 : index
      %33 = vector.load %arg7[%c0_21, %c64] : memref<256x144xbf16, #tpu.memory_space<vmem>>, vector<256x16xbf16>
      tpu.vector_store %arg7[%c0_21, %c64], %32 {strides = array<i32>} : memref<256x144xbf16, #tpu.memory_space<vmem>>, vector<256x16xbf16>,
      %34 = vector.extract_strided_slice %18 {offsets = [1, 2, 0], sizes = [16, 16, 16], strides = [1, 1, 1]} : vector<18x18x16xbf16> to vector<16x16x16xbf16>
      %35 = vector.shape_cast %34 : vector<16x16x16xbf16> to vector<256x16xbf16>
      %c0_22 = arith.constant 0 : index
      %c80 = arith.constant 80 : index
      %36 = vector.load %arg7[%c0_22, %c80] : memref<256x144xbf16, #tpu.memory_space<vmem>>, vector<256x16xbf16>
      tpu.vector_store %arg7[%c0_22, %c80], %35 {strides = array<i32>} : memref<256x144xbf16, #tpu.memory_space<vmem>>, vector<256x16xbf16>,
      %37 = vector.extract_strided_slice %18 {offsets = [2, 0, 0], sizes = [16, 16, 16], strides = [1, 1, 1]} : vector<18x18x16xbf16> to vector<16x16x16xbf16>
      %38 = vector.shape_cast %37 : vector<16x16x16xbf16> to vector<256x16xbf16>
      %c0_23 = arith.constant 0 : index
      %c96 = arith.constant 96 : index
      %39 = vector.load %arg7[%c0_23, %c96] : memref<256x144xbf16, #tpu.memory_space<vmem>>, vector<256x16xbf16>
      tpu.vector_store %arg7[%c0_23, %c96], %38 {strides = array<i32>} : memref<256x144xbf16, #tpu.memory_space<vmem>>, vector<256x16xbf16>,
      %40 = vector.extract_strided_slice %18 {offsets = [2, 1, 0], sizes = [16, 16, 16], strides = [1, 1, 1]} : vector<18x18x16xbf16> to vector<16x16x16xbf16>
      %41 = vector.shape_cast %40 : vector<16x16x16xbf16> to vector<256x16xbf16>
      %c0_24 = arith.constant 0 : index
      %c112 = arith.constant 112 : index
      %42 = vector.load %arg7[%c0_24, %c112] : memref<256x144xbf16, #tpu.memory_space<vmem>>, vector<256x16xbf16>
      tpu.vector_store %arg7[%c0_24, %c112], %41 {strides = array<i32>} : memref<256x144xbf16, #tpu.memory_space<vmem>>, vector<256x16xbf16>,
      %43 = vector.extract_strided_slice %18 {offsets = [2, 2, 0], sizes = [16, 16, 16], strides = [1, 1, 1]} : vector<18x18x16xbf16> to vector<16x16x16xbf16>
      %44 = vector.shape_cast %43 : vector<16x16x16xbf16> to vector<256x16xbf16>
      %c0_25 = arith.constant 0 : index
      %c128 = arith.constant 128 : index
      %45 = vector.load %arg7[%c0_25, %c128] : memref<256x144xbf16, #tpu.memory_space<vmem>>, vector<256x16xbf16>
      tpu.vector_store %arg7[%c0_25, %c128], %44 {strides = array<i32>} : memref<256x144xbf16, #tpu.memory_space<vmem>>, vector<256x16xbf16>,
    } else {
    }
    %c0 = arith.constant 0 : index
    %c0_1 = arith.constant 0 : index
    %3 = vector.load %arg3[%c0, %c0_1] : memref<32x144xbf16, #tpu.memory_space<vmem>>, vector<32x144xbf16>
    %c0_2 = arith.constant 0 : index
    %c0_3 = arith.constant 0 : index
    %4 = vector.load %arg7[%c0_2, %c0_3] : memref<256x144xbf16, #tpu.memory_space<vmem>>, vector<256x144xbf16>
    %cst = arith.constant dense<0.000000e+00> : vector<32x256xf32>
    %5 = tpu.matmul %3, %4, %cst {dimension_numbers = #tpu.dot_dimension_numbers<[1], [1], [0], [0], [0, 0, 1, 0], [], []>} : vector<32x144xbf16>, vector<256x144xbf16>, vector<32x256xf32> -> vector<32x256xf32>
    %c0_4 = arith.constant 0 : index
    %c0_5 = arith.constant 0 : index
    %6 = vector.load %arg4[%c0_4, %c0_5] : memref<32x1xf32, #tpu.memory_space<vmem>>, vector<32x1xf32>
    %7 = vector.broadcast %6 : vector<32x1xf32> to vector<32x256xf32>
    %8 = arith.mulf %5, %7 : vector<32x256xf32>
    %c0_6 = arith.constant 0 : index
    %c0_7 = arith.constant 0 : index
    %9 = vector.load %arg5[%c0_6, %c0_7] : memref<32x1xf32, #tpu.memory_space<vmem>>, vector<32x1xf32>
    %10 = vector.broadcast %9 : vector<32x1xf32> to vector<32x256xf32>
    %11 = arith.addf %8, %10 : vector<32x256xf32>
    %cst_8 = arith.constant 0.000000e+00 : f32
    %12 = vector.broadcast %cst_8 : f32 to vector<32x256xf32>
    %13 = arith.maximumf %11, %12 : vector<32x256xf32>
    %c0_9 = arith.constant 0 : index
    %c0_10 = arith.constant 0 : index
    %c0_11 = arith.constant 0 : index
    %14 = vector.load %arg6[%c0_9, %c0_10, %c0_11] : memref<1x32x256xf32, #tpu.memory_space<vmem>>, vector<1x32x256xf32>
    %15 = vector.shape_cast %14 : vector<1x32x256xf32> to vector<32x256xf32>
    %16 = vector.shape_cast %13 : vector<32x256xf32> to vector<1x32x256xf32>
    tpu.vector_store %arg6[%c0_9, %c0_10, %c0_11], %16 {strides = array<i32>} : memref<1x32x256xf32, #tpu.memory_space<vmem>>, vector<1x32x256xf32>,
    return
  }
  func.func @transform_0(%arg0: i32, %arg1: i32) -> (i32, i32, i32, i32) {
    %c0_i32 = arith.constant 0 : i32
    %c0_i32_0 = arith.constant 0 : i32
    %c0_i32_1 = arith.constant 0 : i32
    %c0_i32_2 = arith.constant 0 : i32
    return %arg0, %c0_i32, %c0_i32_0, %c0_i32_1 : i32, i32, i32, i32
  }
  func.func @transform_1(%arg0: i32, %arg1: i32) -> (i32, i32) {
    %c0_i32 = arith.constant 0 : i32
    %c0_i32_0 = arith.constant 0 : i32
    return %arg1, %c0_i32 : i32, i32
  }
  func.func @transform_2(%arg0: i32, %arg1: i32) -> (i32, i32) {
    %c0_i32 = arith.constant 0 : i32
    %c0_i32_0 = arith.constant 0 : i32
    return %arg1, %c0_i32 : i32, i32
  }
  func.func @transform_3(%arg0: i32, %arg1: i32) -> (i32, i32) {
    %c0_i32 = arith.constant 0 : i32
    %c0_i32_0 = arith.constant 0 : i32
    return %arg1, %c0_i32 : i32, i32
  }
  func.func @transform_4(%arg0: i32, %arg1: i32) -> (i32, i32, i32) {
    %c0_i32 = arith.constant 0 : i32
    %c0_i32_0 = arith.constant 0 : i32
    return %arg0, %arg1, %c0_i32 : i32, i32, i32
  }
}

</mosaic_0001>

<llo_original>
// kernel: conv_bn_relu_forward.1
$region0: #{conv_bn_relu_forward.1}
  #allocation0 [shape = 'u32[]', space=smem, size = 0x4, offset = 0x4, fixed_abs, tag = 'smem constant byte address 0x4 - core index']
  #allocation1 [shape = 'u32[144,128]{1,0:T(1,128)}', space=vmem, size = 0x12000, scoped, tag = 'internal scratch']
  #allocation2 [shape = 'bf16[256,144]{1,0:T(16,128)(2,1)}', space=vmem, size = 0x20000, scoped, tag = 'scratch operand']
  %s0 = inlined_call_operand.vmem [shape: bf16[2,18,18,16], index: 0, kind: input, shape index: {}]
  %s1 = inlined_call_operand.vmem [shape: bf16[32,144], index: 1, kind: input, shape index: {}]
  %s2 = inlined_call_operand.vmem [shape: f32[32,1], index: 2, kind: input, shape index: {}]
  %s3 = inlined_call_operand.vmem [shape: f32[32,1], index: 3, kind: input, shape index: {}]
  %s4 = inlined_call_operand.vmem [shape: f32[2,32,256], index: 4, kind: output, shape index: {}]
  %s5 = sld [smem:[#allocation0]]
  $region53: #{conv_bn_relu_forward.1} parent=0
    _
  %s7 = ssub.s32 1, %s5
  %s8 = scalar_select 0, %s7, %s5
  loop: start=0, step=1, limit=4
  $region2: #{conv_bn_relu_forward.1} parent=0 // loop_pre_header
    _
  $region3: #{conv_bn_relu_forward.1} parent=0 // loop_header
    %s10 = sphi 0, %s14
    %p11 = scmp.ge.s32.totalorder %s10, 4
    %s17 = sphi 0, %s29
    %s18 = sphi 0, %s25
    %s19 = sphi 0, %s17
    %s20 = sphi 0, %s18
    %s21 = sphi 0, %s19
    %s22 = sphi 0, %s20
    %s32 = sphi 0, %s34
    %s35 = sphi 0, %s32
    %s36 = sphi 0, %s35
    %s52 = sphi 0, %s36
    %s58 = sphi 0, %s60
    %s61 = sphi 0, %s58
    %s62 = sphi 0, %s61
    %s78 = sphi 0, %s62
    %s84 = sphi 0, %s86
    %s87 = sphi 0, %s84
    %s88 = sphi 0, %s87
    %s104 = sphi 0, %s88
    %s110 = sphi 0, %s112
    %s113 = sphi 0, %s110
    %s114 = sphi 0, %s113
    %s130 = sphi 0, %s114
    %s138 = sphi 0, %s140
    %s141 = sphi 0, %s138
    %s142 = sphi 0, %s141
    %s158 = sphi 0, %s142
  $region4: #{conv_bn_relu_forward.1} parent=0 // loop_header_branch
    %13 = sbr.rel (%p11) target = $region8
  $region5: #{conv_bn_relu_forward.1} parent=0 // loop_body
    %s15 = ssub.s32 %s10, 1
    %s16 = ssub.s32 %s10, 2
    %s23 = sadd.s32 1, %s18
    %p24 = scmp.ge.s32.totalorder %s23, 1
    %s25 = scalar_select %p24, 0, %s23
    %s26 = sadd.s32 1, %s17
    %s27 = scalar_select %p24, %s26, %s17
    %p28 = scmp.ge.s32.totalorder %s27, 2
    %s29 = scalar_select %p28, 0, %s27
    %s30 = ssub.s32 %s17, %s29
    %p31 = scmp.eq.s32.totalorder %s30, 0
    %s33 = sadd.s32 %s32, 1
    %s34 = scalar_select %p31, %s32, %s33
    %p37 = pneg %p31
    %p38 = scmp.eq.s32.totalorder %s10, 1
    %p39 = por %p37, %p38
    %p40 = scmp.ne.s32.totalorder %s32, %s35
    %p41 = scmp.eq.s32.totalorder %s10, 0
    %p42 = por %p40, %p41
    %p43 = scmp.ne.s32.totalorder %s32, %s35
    %p44 = scmp.eq.s32.totalorder %s15, 1
    %p45 = por %p43, %p44
    %p46 = scmp.ne.s32.totalorder %s35, %s36
    %p47 = scmp.eq.s32.totalorder %s15, 0
    %p48 = por %p46, %p47
    %p49 = scmp.ne.s32.totalorder %s35, %s36
    %p50 = scmp.eq.s32.totalorder %s16, 1
    %p51 = por %p49, %p50
    %p53 = scmp.ne.s32.totalorder %s36, %s52
    %p54 = scmp.eq.s32.totalorder %s16, 0
    %p55 = por %p53, %p54
    %s56 = ssub.s32 %s18, %s25
    %p57 = scmp.eq.s32.totalorder %s56, 0
    %s59 = sadd.s32 %s58, 1
    %s60 = scalar_select %p57, %s58, %s59
    %p63 = pneg %p57
    %p64 = scmp.eq.s32.totalorder %s10, 1
    %p65 = por %p63, %p64
    %p66 = scmp.ne.s32.totalorder %s58, %s61
    %p67 = scmp.eq.s32.totalorder %s10, 0
    %p68 = por %p66, %p67
    %p69 = scmp.ne.s32.totalorder %s58, %s61
    %p70 = scmp.eq.s32.totalorder %s15, 1
    %p71 = por %p69, %p70
    %p72 = scmp.ne.s32.totalorder %s61, %s62
    %p73 = scmp.eq.s32.totalorder %s15, 0
    %p74 = por %p72, %p73
    %p75 = scmp.ne.s32.totalorder %s61, %s62
    %p76 = scmp.eq.s32.totalorder %s16, 1
    %p77 = por %p75, %p76
    %p79 = scmp.ne.s32.totalorder %s62, %s78
    %p80 = scmp.eq.s32.totalorder %s16, 0
    %p81 = por %p79, %p80
    %s82 = ssub.s32 %s18, %s25
    %p83 = scmp.eq.s32.totalorder %s82, 0
    %s85 = sadd.s32 %s84, 1
    %s86 = scalar_select %p83, %s84, %s85
    %p89 = pneg %p83
    %p90 = scmp.eq.s32.totalorder %s10, 1
    %p91 = por %p89, %p90
    %p92 = scmp.ne.s32.totalorder %s84, %s87
    %p93 = scmp.eq.s32.totalorder %s10, 0
    %p94 = por %p92, %p93
    %p95 = scmp.ne.s32.totalorder %s84, %s87
    %p96 = scmp.eq.s32.totalorder %s15, 1
    %p97 = por %p95, %p96
    %p98 = scmp.ne.s32.totalorder %s87, %s88
    %p99 = scmp.eq.s32.totalorder %s15, 0
    %p100 = por %p98, %p99
    %p101 = scmp.ne.s32.totalorder %s87, %s88
    %p102 = scmp.eq.s32.totalorder %s16, 1
    %p103 = por %p101, %p102
    %p105 = scmp.ne.s32.totalorder %s88, %s104
    %p106 = scmp.eq.s32.totalorder %s16, 0
    %p107 = por %p105, %p106
    %s108 = ssub.s32 %s18, %s25
    %p109 = scmp.eq.s32.totalorder %s108, 0
    %s111 = sadd.s32 %s110, 1
    %s112 = scalar_select %p109, %s110, %s111
    %p115 = pneg %p109
    %p116 = scmp.eq.s32.totalorder %s10, 1
    %p117 = por %p115, %p116
    %p118 = scmp.ne.s32.totalorder %s110, %s113
    %p119 = scmp.eq.s32.totalorder %s10, 0
    %p120 = por %p118, %p119
    %p121 = scmp.ne.s32.totalorder %s110, %s113
    %p122 = scmp.eq.s32.totalorder %s15, 1
    %p123 = por %p121, %p122
    %p124 = scmp.ne.s32.totalorder %s113, %s114
    %p125 = scmp.eq.s32.totalorder %s15, 0
    %p126 = por %p124, %p125
    %p127 = scmp.ne.s32.totalorder %s113, %s114
    %p128 = scmp.eq.s32.totalorder %s16, 1
    %p129 = por %p127, %p128
    %p131 = scmp.ne.s32.totalorder %s114, %s130
    %p132 = scmp.eq.s32.totalorder %s16, 0
    %p133 = por %p131, %p132
    %s134 = ssub.s32 %s17, %s29
    %s135 = ssub.s32 %s18, %s25
    %s136 = sor.u32 %s134, %s135
    %p137 = scmp.eq.s32.totalorder %s136, 0
    %s139 = sadd.s32 %s138, 1
    %s140 = scalar_select %p137, %s138, %s139
    %p143 = pneg %p137
    %p144 = scmp.eq.s32.totalorder %s10, 1
    %p145 = por %p143, %p144
    %p146 = scmp.ne.s32.totalorder %s138, %s141
    %p147 = scmp.eq.s32.totalorder %s10, 0
    %p148 = por %p146, %p147
    %p149 = scmp.ne.s32.totalorder %s138, %s141
    %p150 = scmp.eq.s32.totalorder %s15, 1
    %p151 = por %p149, %p150
    %p152 = scmp.ne.s32.totalorder %s141, %s142
    %p153 = scmp.eq.s32.totalorder %s15, 0
    %p154 = por %p152, %p153
    %p155 = scmp.ne.s32.totalorder %s141, %s142
    %p156 = scmp.eq.s32.totalorder %s16, 1
    %p157 = por %p155, %p156
    %p159 = scmp.ne.s32.totalorder %s142, %s158
    %p160 = scmp.eq.s32.totalorder %s16, 0
    %p161 = por %p159, %p160
    %p162 = scmp.le.s32.totalorder 1, %s10
    %p163 = scmp.lt.s32.totalorder %s10, 3
    %p164 = pnand %p162, %p163
    %p165 = pneg %p164
    // Predicated region
    $region9: #{conv_bn_relu_forward.1} parent=5 // pred_check
      _
    $region10: #{conv_bn_relu_forward.1} parent=5 // pred_check_branch
      %167 = sbr.rel (%p164) target = $region12
    $region11: #{conv_bn_relu_forward.1} parent=5 // pred_region
      %s168 = ssub.s32 %s10, 1
      // Predicated region
      $region13: #{conv_bn_relu_forward.1} parent=11 // pred_check
        %p169 = pneg %p74
      $region14: #{conv_bn_relu_forward.1} parent=11 // pred_check_branch
        %171 = sbr.rel (%p169) target = $region16
      $region15: #{conv_bn_relu_forward.1} parent=11 // pred_region
        %s172 = smul.u32 4, %s20
        %p173 = scmp.lt.s32.totalorder %s172, 3
        %s174 = scalar_select %p173, %s172, 3
        %s175 = smul.addr %s174, 2
        %s176 = smul.addr %s175, 4
        %s177 = scalar_lea.vmem %s1, %s176
        %s178 = smul.u32 4, %s20
      $region16: #{conv_bn_relu_forward.1} parent=11 // pred_fallthru
        _
      // Predicated region
      $region17: #{conv_bn_relu_forward.1} parent=11 // pred_check
        %p179 = pneg %p100
      $region18: #{conv_bn_relu_forward.1} parent=11 // pred_check_branch
        %181 = sbr.rel (%p179) target = $region20
      $region19: #{conv_bn_relu_forward.1} parent=11 // pred_region
        %s182 = smul.u32 4, %s20
        %p183 = scmp.lt.s32.totalorder %s182, 3
        %s184 = scalar_select %p183, %s182, 3
        %s185 = smul.addr %s184, 8
        %s186 = scalar_lea.vmem %s2, %s185
        %s187 = smul.u32 4, %s20
      $region20: #{conv_bn_relu_forward.1} parent=11 // pred_fallthru
        _
      // Predicated region
      $region21: #{conv_bn_relu_forward.1} parent=11 // pred_check
        %p188 = pneg %p126
      $region22: #{conv_bn_relu_forward.1} parent=11 // pred_check_branch
        %190 = sbr.rel (%p188) target = $region24
      $region23: #{conv_bn_relu_forward.1} parent=11 // pred_region
        %s191 = smul.u32 4, %s20
        %p192 = scmp.lt.s32.totalorder %s191, 3
        %s193 = scalar_select %p192, %s191, 3
        %s194 = smul.addr %s193, 8
        %s195 = scalar_lea.vmem %s3, %s194
        %s196 = smul.u32 4, %s20
      $region24: #{conv_bn_relu_forward.1} parent=11 // pred_fallthru
        _
    $region12: #{conv_bn_relu_forward.1} parent=5 // pred_fallthru
      _
    %p197 = scmp.lt.s32.totalorder %s10, 2
    // Predicated region
    $region25: #{conv_bn_relu_forward.1} parent=5 // pred_check
      %p198 = pneg %p197
    $region26: #{conv_bn_relu_forward.1} parent=5 // pred_check_branch
      %200 = sbr.rel (%p198) target = $region28
    $region27: #{conv_bn_relu_forward.1} parent=5 // pred_region
      // Predicated region
      $region29: #{conv_bn_relu_forward.1} parent=27 // pred_check
        %p201 = pneg %p42
      $region30: #{conv_bn_relu_forward.1} parent=27 // pred_check_branch
        %203 = sbr.rel (%p201) target = $region32
      $region31: #{conv_bn_relu_forward.1} parent=27 // pred_region
        %p204 = scmp.lt.s32.totalorder %s17, 1
        %s205 = scalar_select %p204, %s17, 1
        %s206 = smul.addr %s205, 54
        %s207 = smul.addr %s206, 4
        %s208 = scalar_lea.vmem %s0, %s207
      $region32: #{conv_bn_relu_forward.1} parent=27 // pred_fallthru
        _
    $region28: #{conv_bn_relu_forward.1} parent=5 // pred_fallthru
      _
    %p209 = scmp.le.s32.totalorder 1, %s10
    %p210 = scmp.lt.s32.totalorder %s10, 3
    %p211 = pnand %p209, %p210
    %p212 = pneg %p211
    // Predicated region
    $region33: #{conv_bn_relu_forward.1} parent=5 // pred_check
      _
    $region34: #{conv_bn_relu_forward.1} parent=5 // pred_check_branch
      %214 = sbr.rel (%p211) target = $region36
    $region35: #{conv_bn_relu_forward.1} parent=5 // pred_region
      %s215 = ssub.s32 %s10, 1
      %p216 = scmp.lt.s32.totalorder %s19, 1
      %s217 = scalar_select %p216, %s19, 1
      %s218 = smul.addr %s217, 54
      %s219 = smul.addr %s218, 4
      %s220 = scalar_lea.vmem %s0, %s219
      %p221 = pneg %p48
      %p222 = pneg %p45
      %s223 = smul.u32 4, %s20
      %p224 = scmp.lt.s32.totalorder %s223, 3
      %s225 = scalar_select %p224, %s223, 3
      %s226 = smul.addr %s225, 2
      %s227 = smul.addr %s226, 4
      %s228 = scalar_lea.vmem %s1, %s227
      %p229 = pneg %p74
      %p230 = pneg %p71
      %s231 = smul.u32 4, %s20
      %p232 = scmp.lt.s32.totalorder %s231, 3
      %s233 = scalar_select %p232, %s231, 3
      %s234 = smul.addr %s233, 8
      %s235 = scalar_lea.vmem %s2, %s234
      %p236 = pneg %p100
      %p237 = pneg %p97
      %s238 = smul.u32 4, %s20
      %p239 = scmp.lt.s32.totalorder %s238, 3
      %s240 = scalar_select %p239, %s238, 3
      %s241 = smul.addr %s240, 8
      %s242 = scalar_lea.vmem %s3, %s241
      %p243 = pneg %p126
      %p244 = pneg %p123
      %p245 = pneg %p154
      %p246 = pneg %p151
      %s247 = smul.u32 4, %s20
      %p248 = scmp.lt.s32.totalorder %s19, 1
      %s249 = scalar_select %p248, %s19, 1
      %p250 = scmp.lt.s32.totalorder %s247, 3
      %s251 = scalar_select %p250, %s247, 3
      %s252 = smul.addr %s251, 2
      %s253 = smul.addr %s249, 8
      %s254 = sadd.s32 %s252, %s253
      %s255 = smul.addr %s254, 8
      %s256 = scalar_lea.vmem %s4, %s255
      %p257 = scmp.lt.s32.totalorder %s19, 1
      %s258 = scalar_select %p257, %s19, 1
      %s259 = smul.addr %s258, 54
      %s260 = smul.addr %s259, 4
      %s261 = scalar_lea.vmem %s0, %s260
      %s262 = smul.u32 4, %s20
      %p263 = scmp.lt.s32.totalorder %s262, 3
      %s264 = scalar_select %p263, %s262, 3
      %s265 = smul.addr %s264, 2
      %s266 = smul.addr %s265, 4
      %s267 = scalar_lea.vmem %s1, %s266
      %s268 = smul.u32 4, %s20
      %s269 = smul.u32 4, %s20
      %p270 = scmp.lt.s32.totalorder %s269, 3
      %s271 = scalar_select %p270, %s269, 3
      %s272 = smul.addr %s271, 8
      %s273 = scalar_lea.vmem %s2, %s272
      %s274 = smul.u32 4, %s20
      %s275 = smul.u32 4, %s20
      %p276 = scmp.lt.s32.totalorder %s275, 3
      %s277 = scalar_select %p276, %s275, 3
      %s278 = smul.addr %s277, 8
      %s279 = scalar_lea.vmem %s3, %s278
      %s280 = smul.u32 4, %s20
      %s281 = smul.u32 4, %s20
      %p282 = scmp.lt.s32.totalorder %s19, 1
      %s283 = scalar_select %p282, %s19, 1
      %p284 = scmp.lt.s32.totalorder %s281, 3
      %s285 = scalar_select %p284, %s281, 3
      %s286 = smul.addr %s285, 2
      %s287 = smul.addr %s283, 8
      %s288 = sadd.s32 %s286, %s287
      %s289 = smul.addr %s288, 8
      %s290 = scalar_lea.vmem %s4, %s289
      %s291 = smul.u32 4, %s20
      %p292 = scmp.eq.s32.totalorder %s20, 0
      // Predicated region
      $region37: #{conv_bn_relu_forward.1} parent=35 // pred_check
        %p293 = pneg %p292
      $region38: #{conv_bn_relu_forward.1} parent=35 // pred_check_branch
        %295 = sbr.rel (%p293) target = $region40
      $region39: #{conv_bn_relu_forward.1} parent=35 // pred_region
        %v296 = vld [vmem:[%s261] sm:$0xf]
        %v297 = vld [vmem:[%s261 + $0x4] sm:$0xf]
        %v298 = vld [vmem:[%s261 + $0x8] sm:$0x1]
        %v299 = vld [vmem:[%s261 + $0xc] sm:$0xf]
        %v300 = vld [vmem:[%s261 + $0x10] sm:$0xf]
        %v301 = vld [vmem:[%s261 + $0x14] sm:$0x1]
        %v302 = vld [vmem:[%s261 + $0x18] sm:$0xf]
        %v303 = vld [vmem:[%s261 + $0x1c] sm:$0xf]
        %v304 = vld [vmem:[%s261 + $0x20] sm:$0x1]
        %v305 = vld [vmem:[%s261 + $0x24] sm:$0xf]
        %v306 = vld [vmem:[%s261 + $0x28] sm:$0xf]
        %v307 = vld [vmem:[%s261 + $0x2c] sm:$0x1]
        %v308 = vld [vmem:[%s261 + $0x30] sm:$0xf]
        %v309 = vld [vmem:[%s261 + $0x34] sm:$0xf]
        %v310 = vld [vmem:[%s261 + $0x38] sm:$0x1]
        %v311 = vld [vmem:[%s261 + $0x3c] sm:$0xf]
        %v312 = vld [vmem:[%s261 + $0x40] sm:$0xf]
        %v313 = vld [vmem:[%s261 + $0x44] sm:$0x1]
        %v314 = vld [vmem:[%s261 + $0x48] sm:$0xf]
        %v315 = vld [vmem:[%s261 + $0x4c] sm:$0xf]
        %v316 = vld [vmem:[%s261 + $0x50] sm:$0x1]
        %v317 = vld [vmem:[%s261 + $0x54] sm:$0xf]
        %v318 = vld [vmem:[%s261 + $0x58] sm:$0xf]
        %v319 = vld [vmem:[%s261 + $0x5c] sm:$0x1]
        %v320 = vld [vmem:[%s261 + $0x60] sm:$0xf]
        %v321 = vld [vmem:[%s261 + $0x64] sm:$0xf]
        %v322 = vld [vmem:[%s261 + $0x68] sm:$0x1]
        %v323 = vld [vmem:[%s261 + $0x6c] sm:$0xf]
        %v324 = vld [vmem:[%s261 + $0x70] sm:$0xf]
        %v325 = vld [vmem:[%s261 + $0x74] sm:$0x1]
        %v326 = vld [vmem:[%s261 + $0x78] sm:$0xf]
        %v327 = vld [vmem:[%s261 + $0x7c] sm:$0xf]
        %v328 = vld [vmem:[%s261 + $0x80] sm:$0x1]
        %v329 = vld [vmem:[%s261 + $0x84] sm:$0xf]
        %v330 = vld [vmem:[%s261 + $0x88] sm:$0xf]
        %v331 = vld [vmem:[%s261 + $0x8c] sm:$0x1]
        %v332 = vld [vmem:[%s261 + $0x90] sm:$0xf]
        %v333 = vld [vmem:[%s261 + $0x94] sm:$0xf]
        %v334 = vld [vmem:[%s261 + $0x98] sm:$0x1]
        %v335 = vld [vmem:[%s261 + $0x9c] sm:$0xf]
        %v336 = vld [vmem:[%s261 + $0xa0] sm:$0xf]
        %v337 = vld [vmem:[%s261 + $0xa4] sm:$0x1]
        %v338 = vld [vmem:[%s261 + $0xa8] sm:$0xf]
        %v339 = vld [vmem:[%s261 + $0xac] sm:$0xf]
        %v340 = vld [vmem:[%s261 + $0xb0] sm:$0x1]
        %v341 = vld [vmem:[%s261 + $0xb4] sm:$0xf]
        %v342 = vld [vmem:[%s261 + $0xb8] sm:$0xf]
        %v343 = vld [vmem:[%s261 + $0xbc] sm:$0x1]
        %v344 = vld [vmem:[%s261 + $0xc0] sm:$0xf]
        %v345 = vld [vmem:[%s261 + $0xc4] sm:$0xf]
        %v346 = vld [vmem:[%s261 + $0xc8] sm:$0x1]
        %v347 = vld [vmem:[%s261 + $0xcc] sm:$0xf]
        %v348 = vld [vmem:[%s261 + $0xd0] sm:$0xf]
        %v349 = vld [vmem:[%s261 + $0xd4] sm:$0x1]
        %v382 = vunpack.c.l.b16 %v296
        %v383 = vunpack.c.l.b16 %v297
        %v384 = vunpack.c.l.b16 %v299
        %v385 = vunpack.c.l.b16 %v300
        %v386 = vunpack.c.l.b16 %v302
        %v387 = vunpack.c.l.b16 %v303
        %v388 = vunpack.c.l.b16 %v305
        %v389 = vunpack.c.l.b16 %v306
        %v390 = vunpack.c.l.b16 %v308
        %v391 = vunpack.c.l.b16 %v309
        %v392 = vunpack.c.l.b16 %v311
        %v393 = vunpack.c.l.b16 %v312
        %v394 = vunpack.c.l.b16 %v314
        %v395 = vunpack.c.l.b16 %v315
        %v396 = vunpack.c.l.b16 %v317
        %v397 = vunpack.c.l.b16 %v318
        %v398 = vunpack.c.l.b16 %v320
        %v399 = vunpack.c.l.b16 %v321
        %v400 = vunpack.c.l.b16 %v323
        %v401 = vunpack.c.l.b16 %v324
        %v402 = vunpack.c.l.b16 %v326
        %v403 = vunpack.c.l.b16 %v327
        %v404 = vunpack.c.l.b16 %v329
        %v405 = vunpack.c.l.b16 %v330
        %v406 = vunpack.c.l.b16 %v332
        %v407 = vunpack.c.l.b16 %v333
        %v408 = vunpack.c.l.b16 %v335
        %v409 = vunpack.c.l.b16 %v336
        %v410 = vunpack.c.l.b16 %v338
        %v411 = vunpack.c.l.b16 %v339
        %v412 = vunpack.c.l.b16 %v341
        %v413 = vunpack.c.l.b16 %v342
        %v414 = vpack.c.b16 %v383, %v382
        %v415 = vpack.c.b16 %v385, %v384
        %v416 = vpack.c.b16 %v387, %v386
        %v417 = vpack.c.b16 %v389, %v388
        %v418 = vpack.c.b16 %v391, %v390
        %v419 = vpack.c.b16 %v393, %v392
        %v420 = vpack.c.b16 %v395, %v394
        %v421 = vpack.c.b16 %v397, %v396
        %v422 = vpack.c.b16 %v399, %v398
        %v423 = vpack.c.b16 %v401, %v400
        %v424 = vpack.c.b16 %v403, %v402
        %v425 = vpack.c.b16 %v405, %v404
        %v426 = vpack.c.b16 %v407, %v406
        %v427 = vpack.c.b16 %v409, %v408
        %v428 = vpack.c.b16 %v411, %v410
        %v429 = vpack.c.b16 %v413, %v412
        %vm446 = vcmask 130048
        %447 = vst.msk [vmem:[#allocation2] sm:$0xff] %vm446, %v414
        %448 = vst.msk [vmem:[#allocation2 + $0x10] sm:$0xff] %vm446, %v415
        %449 = vst.msk [vmem:[#allocation2 + $0x20] sm:$0xff] %vm446, %v416
        %450 = vst.msk [vmem:[#allocation2 + $0x30] sm:$0xff] %vm446, %v417
        %451 = vst.msk [vmem:[#allocation2 + $0x40] sm:$0xff] %vm446, %v418
        %452 = vst.msk [vmem:[#allocation2 + $0x50] sm:$0xff] %vm446, %v419
        %453 = vst.msk [vmem:[#allocation2 + $0x60] sm:$0xff] %vm446, %v420
        %454 = vst.msk [vmem:[#allocation2 + $0x70] sm:$0xff] %vm446, %v421
        %455 = vst.msk [vmem:[#allocation2 + $0x80] sm:$0xff] %vm446, %v422
        %456 = vst.msk [vmem:[#allocation2 + $0x90] sm:$0xff] %vm446, %v423
        %457 = vst.msk [vmem:[#allocation2 + $0xa0] sm:$0xff] %vm446, %v424
        %458 = vst.msk [vmem:[#allocation2 + $0xb0] sm:$0xff] %vm446, %v425
        %459 = vst.msk [vmem:[#allocation2 + $0xc0] sm:$0xff] %vm446, %v426
        %460 = vst.msk [vmem:[#allocation2 + $0xd0] sm:$0xff] %vm446, %v427
        %461 = vst.msk [vmem:[#allocation2 + $0xe0] sm:$0xff] %vm446, %v428
        %462 = vst.msk [vmem:[#allocation2 + $0xf0] sm:$0xff] %vm446, %v429
        %vm463 = vsmask.f32 3328
        %vm464 = vsmask.f32 7440
        %vm465 = vmor %vm463, %vm464
        %v467 = vshrl.u32 %v296, 16
        %v469 = vrot.slane %v467, 4
        %v470 = vshll.u32 %v296, 16
        %v472 = vrot.slane %v470, 5
        %v473 = vor.u32 %v469, %v472
        %v474 = vrot.slane %v473, 4
        %v476 = vshll.u32 %v297, 16
        %v478 = vrot.slane %v476, 5
        %v479 = vsel %vm465, %v474, %v478
        %v480 = vshrl.u32 %v297, 16
        %v482 = vrot.slane %v480, 4
        %v483 = vor.u32 %v482, %v478
        %v484 = vrot.slane %v483, 4
        %v486 = vshll.u32 %v298, 16
        %v488 = vrot.slane %v486, 5
        %v489 = vsel %vm465, %v484, %v488
        %v491 = vshrl.u32 %v299, 16
        %v493 = vrot.slane %v491, 4
        %v494 = vshll.u32 %v299, 16
        %v496 = vrot.slane %v494, 5
        %v497 = vor.u32 %v493, %v496
        %v498 = vrot.slane %v497, 4
        %v500 = vshll.u32 %v300, 16
        %v502 = vrot.slane %v500, 5
        %v503 = vsel %vm465, %v498, %v502
        %v504 = vshrl.u32 %v300, 16
        %v506 = vrot.slane %v504, 4
        %v507 = vor.u32 %v506, %v502
        %v508 = vrot.slane %v507, 4
        %v510 = vshll.u32 %v301, 16
        %v512 = vrot.slane %v510, 5
        %v513 = vsel %vm465, %v508, %v512
        %v515 = vshrl.u32 %v302, 16
        %v517 = vrot.slane %v515, 4
        %v518 = vshll.u32 %v302, 16
        %v520 = vrot.slane %v518, 5
        %v521 = vor.u32 %v517, %v520
        %v522 = vrot.slane %v521, 4
        %v524 = vshll.u32 %v303, 16
        %v526 = vrot.slane %v524, 5
        %v527 = vsel %vm465, %v522, %v526
        %v528 = vshrl.u32 %v303, 16
        %v530 = vrot.slane %v528, 4
        %v531 = vor.u32 %v530, %v526
        %v532 = vrot.slane %v531, 4
        %v534 = vshll.u32 %v304, 16
        %v536 = vrot.slane %v534, 5
        %v537 = vsel %vm465, %v532, %v536
        %v539 = vshrl.u32 %v305, 16
        %v541 = vrot.slane %v539, 4
        %v542 = vshll.u32 %v305, 16
        %v544 = vrot.slane %v542, 5
        %v545 = vor.u32 %v541, %v544
        %v546 = vrot.slane %v545, 4
        %v548 = vshll.u32 %v306, 16
        %v550 = vrot.slane %v548, 5
        %v551 = vsel %vm465, %v546, %v550
        %v552 = vshrl.u32 %v306, 16
        %v554 = vrot.slane %v552, 4
        %v555 = vor.u32 %v554, %v550
        %v556 = vrot.slane %v555, 4
        %v558 = vshll.u32 %v307, 16
        %v560 = vrot.slane %v558, 5
        %v561 = vsel %vm465, %v556, %v560
        %v563 = vshrl.u32 %v308, 16
        %v565 = vrot.slane %v563, 4
        %v566 = vshll.u32 %v308, 16
        %v568 = vrot.slane %v566, 5
        %v569 = vor.u32 %v565, %v568
        %v570 = vrot.slane %v569, 4
        %v572 = vshll.u32 %v309, 16
        %v574 = vrot.slane %v572, 5
        %v575 = vsel %vm465, %v570, %v574
        %v576 = vshrl.u32 %v309, 16
        %v578 = vrot.slane %v576, 4
        %v579 = vor.u32 %v578, %v574
        %v580 = vrot.slane %v579, 4
        %v582 = vshll.u32 %v310, 16
        %v584 = vrot.slane %v582, 5
        %v585 = vsel %vm465, %v580, %v584
        %v587 = vshrl.u32 %v311, 16
        %v589 = vrot.slane %v587, 4
        %v590 = vshll.u32 %v311, 16
        %v592 = vrot.slane %v590, 5
        %v593 = vor.u32 %v589, %v592
        %v594 = vrot.slane %v593, 4
        %v596 = vshll.u32 %v312, 16
        %v598 = vrot.slane %v596, 5
        %v599 = vsel %vm465, %v594, %v598
        %v600 = vshrl.u32 %v312, 16
        %v602 = vrot.slane %v600, 4
        %v603 = vor.u32 %v602, %v598
        %v604 = vrot.slane %v603, 4
        %v606 = vshll.u32 %v313, 16
        %v608 = vrot.slane %v606, 5
        %v609 = vsel %vm465, %v604, %v608
        %v611 = vshrl.u32 %v314, 16
        %v613 = vrot.slane %v611, 4
        %v614 = vshll.u32 %v314, 16
        %v616 = vrot.slane %v614, 5
        %v617 = vor.u32 %v613, %v616
        %v618 = vrot.slane %v617, 4
        %v620 = vshll.u32 %v315, 16
        %v622 = vrot.slane %v620, 5
        %v623 = vsel %vm465, %v618, %v622
        %v624 = vshrl.u32 %v315, 16
        %v626 = vrot.slane %v624, 4
        %v627 = vor.u32 %v626, %v622
        %v628 = vrot.slane %v627, 4
        %v630 = vshll.u32 %v316, 16
        %v632 = vrot.slane %v630, 5
        %v633 = vsel %vm465, %v628, %v632
        %v635 = vshrl.u32 %v317, 16
        %v637 = vrot.slane %v635, 4
        %v638 = vshll.u32 %v317, 16
        %v640 = vrot.slane %v638, 5
        %v641 = vor.u32 %v637, %v640
        %v642 = vrot.slane %v641, 4
        %v644 = vshll.u32 %v318, 16
        %v646 = vrot.slane %v644, 5
        %v647 = vsel %vm465, %v642, %v646
        %v648 = vshrl.u32 %v318, 16
        %v650 = vrot.slane %v648, 4
        %v651 = vor.u32 %v650, %v646
        %v652 = vrot.slane %v651, 4
        %v654 = vshll.u32 %v319, 16
        %v656 = vrot.slane %v654, 5
        %v657 = vsel %vm465, %v652, %v656
        %v659 = vshrl.u32 %v320, 16
        %v661 = vrot.slane %v659, 4
        %v662 = vshll.u32 %v320, 16
        %v664 = vrot.slane %v662, 5
        %v665 = vor.u32 %v661, %v664
        %v666 = vrot.slane %v665, 4
        %v668 = vshll.u32 %v321, 16
        %v670 = vrot.slane %v668, 5
        %v671 = vsel %vm465, %v666, %v670
        %v672 = vshrl.u32 %v321, 16
        %v674 = vrot.slane %v672, 4
        %v675 = vor.u32 %v674, %v670
        %v676 = vrot.slane %v675, 4
        %v678 = vshll.u32 %v322, 16
        %v680 = vrot.slane %v678, 5
        %v681 = vsel %vm465, %v676, %v680
        %v683 = vshrl.u32 %v323, 16
        %v685 = vrot.slane %v683, 4
        %v686 = vshll.u32 %v323, 16
        %v688 = vrot.slane %v686, 5
        %v689 = vor.u32 %v685, %v688
        %v690 = vrot.slane %v689, 4
        %v692 = vshll.u32 %v324, 16
        %v694 = vrot.slane %v692, 5
        %v695 = vsel %vm465, %v690, %v694
        %v696 = vshrl.u32 %v324, 16
        %v698 = vrot.slane %v696, 4
        %v699 = vor.u32 %v698, %v694
        %v700 = vrot.slane %v699, 4
        %v702 = vshll.u32 %v325, 16
        %v704 = vrot.slane %v702, 5
        %v705 = vsel %vm465, %v700, %v704
        %v707 = vshrl.u32 %v326, 16
        %v709 = vrot.slane %v707, 4
        %v710 = vshll.u32 %v326, 16
        %v712 = vrot.slane %v710, 5
        %v713 = vor.u32 %v709, %v712
        %v714 = vrot.slane %v713, 4
        %v716 = vshll.u32 %v327, 16
        %v718 = vrot.slane %v716, 5
        %v719 = vsel %vm465, %v714, %v718
        %v720 = vshrl.u32 %v327, 16
        %v722 = vrot.slane %v720, 4
        %v723 = vor.u32 %v722, %v718
        %v724 = vrot.slane %v723, 4
        %v726 = vshll.u32 %v328, 16
        %v728 = vrot.slane %v726, 5
        %v729 = vsel %vm465, %v724, %v728
        %v731 = vshrl.u32 %v329, 16
        %v733 = vrot.slane %v731, 4
        %v734 = vshll.u32 %v329, 16
        %v736 = vrot.slane %v734, 5
        %v737 = vor.u32 %v733, %v736
        %v738 = vrot.slane %v737, 4
        %v740 = vshll.u32 %v330, 16
        %v742 = vrot.slane %v740, 5
        %v743 = vsel %vm465, %v738, %v742
        %v744 = vshrl.u32 %v330, 16
        %v746 = vrot.slane %v744, 4
        %v747 = vor.u32 %v746, %v742
        %v748 = vrot.slane %v747, 4
        %v750 = vshll.u32 %v331, 16
        %v752 = vrot.slane %v750, 5
        %v753 = vsel %vm465, %v748, %v752
        %v755 = vshrl.u32 %v332, 16
        %v757 = vrot.slane %v755, 4
        %v758 = vshll.u32 %v332, 16
        %v760 = vrot.slane %v758, 5
        %v761 = vor.u32 %v757, %v760
        %v762 = vrot.slane %v761, 4
        %v764 = vshll.u32 %v333, 16
        %v766 = vrot.slane %v764, 5
        %v767 = vsel %vm465, %v762, %v766
        %v768 = vshrl.u32 %v333, 16
        %v770 = vrot.slane %v768, 4
        %v771 = vor.u32 %v770, %v766
        %v772 = vrot.slane %v771, 4
        %v774 = vshll.u32 %v334, 16
        %v776 = vrot.slane %v774, 5
        %v777 = vsel %vm465, %v772, %v776
        %v779 = vshrl.u32 %v335, 16
        %v781 = vrot.slane %v779, 4
        %v782 = vshll.u32 %v335, 16
        %v784 = vrot.slane %v782, 5
        %v785 = vor.u32 %v781, %v784
        %v786 = vrot.slane %v785, 4
        %v788 = vshll.u32 %v336, 16
        %v790 = vrot.slane %v788, 5
        %v791 = vsel %vm465, %v786, %v790
        %v792 = vshrl.u32 %v336, 16
        %v794 = vrot.slane %v792, 4
        %v795 = vor.u32 %v794, %v790
        %v796 = vrot.slane %v795, 4
        %v798 = vshll.u32 %v337, 16
        %v800 = vrot.slane %v798, 5
        %v801 = vsel %vm465, %v796, %v800
        %v803 = vshrl.u32 %v338, 16
        %v805 = vrot.slane %v803, 4
        %v806 = vshll.u32 %v338, 16
        %v808 = vrot.slane %v806, 5
        %v809 = vor.u32 %v805, %v808
        %v810 = vrot.slane %v809, 4
        %v812 = vshll.u32 %v339, 16
        %v814 = vrot.slane %v812, 5
        %v815 = vsel %vm465, %v810, %v814
        %v816 = vshrl.u32 %v339, 16
        %v818 = vrot.slane %v816, 4
        %v819 = vor.u32 %v818, %v814
        %v820 = vrot.slane %v819, 4
        %v822 = vshll.u32 %v340, 16
        %v824 = vrot.slane %v822, 5
        %v825 = vsel %vm465, %v820, %v824
        %v827 = vshrl.u32 %v341, 16
        %v829 = vrot.slane %v827, 4
        %v830 = vshll.u32 %v341, 16
        %v832 = vrot.slane %v830, 5
        %v833 = vor.u32 %v829, %v832
        %v834 = vrot.slane %v833, 4
        %v836 = vshll.u32 %v342, 16
        %v838 = vrot.slane %v836, 5
        %v839 = vsel %vm465, %v834, %v838
        %v840 = vshrl.u32 %v342, 16
        %v842 = vrot.slane %v840, 4
        %v843 = vor.u32 %v842, %v838
        %v844 = vrot.slane %v843, 4
        %v846 = vshll.u32 %v343, 16
        %v848 = vrot.slane %v846, 5
        %v849 = vsel %vm465, %v844, %v848
        %v850 = vunpack.c.l.b16 %v479
        %v851 = vunpack.c.l.b16 %v489
        %v852 = vunpack.c.l.b16 %v503
        %v853 = vunpack.c.l.b16 %v513
        %v854 = vunpack.c.l.b16 %v527
        %v855 = vunpack.c.l.b16 %v537
        %v856 = vunpack.c.l.b16 %v551
        %v857 = vunpack.c.l.b16 %v561
        %v858 = vunpack.c.l.b16 %v575
        %v859 = vunpack.c.l.b16 %v585
        %v860 = vunpack.c.l.b16 %v599
        %v861 = vunpack.c.l.b16 %v609
        %v862 = vunpack.c.l.b16 %v623
        %v863 = vunpack.c.l.b16 %v633
        %v864 = vunpack.c.l.b16 %v647
        %v865 = vunpack.c.l.b16 %v657
        %v866 = vunpack.c.l.b16 %v671
        %v867 = vunpack.c.l.b16 %v681
        %v868 = vunpack.c.l.b16 %v695
        %v869 = vunpack.c.l.b16 %v705
        %v870 = vunpack.c.l.b16 %v719
        %v871 = vunpack.c.l.b16 %v729
        %v872 = vunpack.c.l.b16 %v743
        %v873 = vunpack.c.l.b16 %v753
        %v874 = vunpack.c.l.b16 %v767
        %v875 = vunpack.c.l.b16 %v777
        %v876 = vunpack.c.l.b16 %v791
        %v877 = vunpack.c.l.b16 %v801
        %v878 = vunpack.c.l.b16 %v815
        %v879 = vunpack.c.l.b16 %v825
        %v880 = vunpack.c.l.b16 %v839
        %v881 = vunpack.c.l.b16 %v849
        %v882 = vpack.c.b16 %v851, %v850
        %v883 = vpack.c.b16 %v853, %v852
        %v884 = vpack.c.b16 %v855, %v854
        %v885 = vpack.c.b16 %v857, %v856
        %v886 = vpack.c.b16 %v859, %v858
        %v887 = vpack.c.b16 %v861, %v860
        %v888 = vpack.c.b16 %v863, %v862
        %v889 = vpack.c.b16 %v865, %v864
        %v890 = vpack.c.b16 %v867, %v866
        %v891 = vpack.c.b16 %v869, %v868
        %v892 = vpack.c.b16 %v871, %v870
        %v893 = vpack.c.b16 %v873, %v872
        %v894 = vpack.c.b16 %v875, %v874
        %v895 = vpack.c.b16 %v877, %v876
        %v896 = vpack.c.b16 %v879, %v878
        %v897 = vpack.c.b16 %v881, %v880
        %898 = vrot.lane.b32.xlu0 %v882, 16
        %v899 = vpop.permute.xlu0 %898
        %900 = vrot.lane.b32.xlu0 %v883, 16
        %v901 = vpop.permute.xlu0 %900
        %902 = vrot.lane.b32.xlu0 %v884, 16
        %v903 = vpop.permute.xlu0 %902
        %904 = vrot.lane.b32.xlu0 %v885, 16
        %v905 = vpop.permute.xlu0 %904
        %906 = vrot.lane.b32.xlu0 %v886, 16
        %v907 = vpop.permute.xlu0 %906
        %908 = vrot.lane.b32.xlu0 %v887, 16
        %v909 = vpop.permute.xlu0 %908
        %910 = vrot.lane.b32.xlu0 %v888, 16
        %v911 = vpop.permute.xlu0 %910
        %912 = vrot.lane.b32.xlu0 %v889, 16
        %v913 = vpop.permute.xlu0 %912
        %914 = vrot.lane.b32.xlu0 %v890, 16
        %v915 = vpop.permute.xlu0 %914
        %916 = vrot.lane.b32.xlu0 %v891, 16
        %v917 = vpop.permute.xlu0 %916
        %918 = vrot.lane.b32.xlu0 %v892, 16
        %v919 = vpop.permute.xlu0 %918
        %920 = vrot.lane.b32.xlu0 %v893, 16
        %v921 = vpop.permute.xlu0 %920
        %922 = vrot.lane.b32.xlu0 %v894, 16
        %v923 = vpop.permute.xlu0 %922
        %924 = vrot.lane.b32.xlu0 %v895, 16
        %v925 = vpop.permute.xlu0 %924
        %926 = vrot.lane.b32.xlu0 %v896, 16
        %v927 = vpop.permute.xlu0 %926
        %928 = vrot.lane.b32.xlu0 %v897, 16
        %v929 = vpop.permute.xlu0 %928
        %vm946 = vcmask 261248
        %947 = vst.msk [vmem:[#allocation2] sm:$0xff] %vm946, %v899
        %948 = vst.msk [vmem:[#allocation2 + $0x10] sm:$0xff] %vm946, %v901
        %949 = vst.msk [vmem:[#allocation2 + $0x20] sm:$0xff] %vm946, %v903
        %950 = vst.msk [vmem:[#allocation2 + $0x30] sm:$0xff] %vm946, %v905
        %951 = vst.msk [vmem:[#allocation2 + $0x40] sm:$0xff] %vm946, %v907
        %952 = vst.msk [vmem:[#allocation2 + $0x50] sm:$0xff] %vm946, %v909
        %953 = vst.msk [vmem:[#allocation2 + $0x60] sm:$0xff] %vm946, %v911
        %954 = vst.msk [vmem:[#allocation2 + $0x70] sm:$0xff] %vm946, %v913
        %955 = vst.msk [vmem:[#allocation2 + $0x80] sm:$0xff] %vm946, %v915
        %956 = vst.msk [vmem:[#allocation2 + $0x90] sm:$0xff] %vm946, %v917
        %957 = vst.msk [vmem:[#allocation2 + $0xa0] sm:$0xff] %vm946, %v919
        %958 = vst.msk [vmem:[#allocation2 + $0xb0] sm:$0xff] %vm946, %v921
        %959 = vst.msk [vmem:[#allocation2 + $0xc0] sm:$0xff] %vm946, %v923
        %960 = vst.msk [vmem:[#allocation2 + $0xd0] sm:$0xff] %vm946, %v925
        %961 = vst.msk [vmem:[#allocation2 + $0xe0] sm:$0xff] %vm946, %v927
        %962 = vst.msk [vmem:[#allocation2 + $0xf0] sm:$0xff] %vm946, %v929
        %vm979 = vcmask 1042432
        %vm980 = vcmask 1046532
        %vm981 = vmor %vm979, %vm980
        %v982 = vrot.slane %v296, 5
        %v983 = vrot.slane %v982, 4
        %v984 = vrot.slane %v297, 5
        %v985 = vsel %vm981, %v983, %v984
        %v986 = vrot.slane %v984, 4
        %v987 = vrot.slane %v298, 5
        %v988 = vsel %vm981, %v986, %v987
        %v989 = vrot.slane %v299, 5
        %v990 = vrot.slane %v989, 4
        %v991 = vrot.slane %v300, 5
        %v992 = vsel %vm981, %v990, %v991
        %v993 = vrot.slane %v991, 4
        %v994 = vrot.slane %v301, 5
        %v995 = vsel %vm981, %v993, %v994
        %v996 = vrot.slane %v302, 5
        %v997 = vrot.slane %v996, 4
        %v998 = vrot.slane %v303, 5
        %v999 = vsel %vm981, %v997, %v998
        %v1000 = vrot.slane %v998, 4
        %v1001 = vrot.slane %v304, 5
        %v1002 = vsel %vm981, %v1000, %v1001
        %v1003 = vrot.slane %v305, 5
        %v1004 = vrot.slane %v1003, 4
        %v1005 = vrot.slane %v306, 5
        %v1006 = vsel %vm981, %v1004, %v1005
        %v1007 = vrot.slane %v1005, 4
        %v1008 = vrot.slane %v307, 5
        %v1009 = vsel %vm981, %v1007, %v1008
        %v1010 = vrot.slane %v308, 5
        %v1011 = vrot.slane %v1010, 4
        %v1012 = vrot.slane %v309, 5
        %v1013 = vsel %vm981, %v1011, %v1012
        %v1014 = vrot.slane %v1012, 4
        %v1015 = vrot.slane %v310, 5
        %v1016 = vsel %vm981, %v1014, %v1015
        %v1017 = vrot.slane %v311, 5
        %v1018 = vrot.slane %v1017, 4
        %v1019 = vrot.slane %v312, 5
        %v1020 = vsel %vm981, %v1018, %v1019
        %v1021 = vrot.slane %v1019, 4
        %v1022 = vrot.slane %v313, 5
        %v1023 = vsel %vm981, %v1021, %v1022
        %v1024 = vrot.slane %v314, 5
        %v1025 = vrot.slane %v1024, 4
        %v1026 = vrot.slane %v315, 5
        %v1027 = vsel %vm981, %v1025, %v1026
        %v1028 = vrot.slane %v1026, 4
        %v1029 = vrot.slane %v316, 5
        %v1030 = vsel %vm981, %v1028, %v1029
        %v1031 = vrot.slane %v317, 5
        %v1032 = vrot.slane %v1031, 4
        %v1033 = vrot.slane %v318, 5
        %v1034 = vsel %vm981, %v1032, %v1033
        %v1035 = vrot.slane %v1033, 4
        %v1036 = vrot.slane %v319, 5
        %v1037 = vsel %vm981, %v1035, %v1036
        %v1038 = vrot.slane %v320, 5
        %v1039 = vrot.slane %v1038, 4
        %v1040 = vrot.slane %v321, 5
        %v1041 = vsel %vm981, %v1039, %v1040
        %v1042 = vrot.slane %v1040, 4
        %v1043 = vrot.slane %v322, 5
        %v1044 = vsel %vm981, %v1042, %v1043
        %v1045 = vrot.slane %v323, 5
        %v1046 = vrot.slane %v1045, 4
        %v1047 = vrot.slane %v324, 5
        %v1048 = vsel %vm981, %v1046, %v1047
        %v1049 = vrot.slane %v1047, 4
        %v1050 = vrot.slane %v325, 5
        %v1051 = vsel %vm981, %v1049, %v1050
        %v1052 = vrot.slane %v326, 5
        %v1053 = vrot.slane %v1052, 4
        %v1054 = vrot.slane %v327, 5
        %v1055 = vsel %vm981, %v1053, %v1054
        %v1056 = vrot.slane %v1054, 4
        %v1057 = vrot.slane %v328, 5
        %v1058 = vsel %vm981, %v1056, %v1057
        %v1059 = vrot.slane %v329, 5
        %v1060 = vrot.slane %v1059, 4
        %v1061 = vrot.slane %v330, 5
        %v1062 = vsel %vm981, %v1060, %v1061
        %v1063 = vrot.slane %v1061, 4
        %v1064 = vrot.slane %v331, 5
        %v1065 = vsel %vm981, %v1063, %v1064
        %v1066 = vrot.slane %v332, 5
        %v1067 = vrot.slane %v1066, 4
        %v1068 = vrot.slane %v333, 5
        %v1069 = vsel %vm981, %v1067, %v1068
        %v1070 = vrot.slane %v1068, 4
        %v1071 = vrot.slane %v334, 5
        %v1072 = vsel %vm981, %v1070, %v1071
        %v1073 = vrot.slane %v335, 5
        %v1074 = vrot.slane %v1073, 4
        %v1075 = vrot.slane %v336, 5
        %v1076 = vsel %vm981, %v1074, %v1075
        %v1077 = vrot.slane %v1075, 4
        %v1078 = vrot.slane %v337, 5
        %v1079 = vsel %vm981, %v1077, %v1078
        %v1080 = vrot.slane %v338, 5
        %v1081 = vrot.slane %v1080, 4
        %v1082 = vrot.slane %v339, 5
        %v1083 = vsel %vm981, %v1081, %v1082
        %v1084 = vrot.slane %v1082, 4
        %v1085 = vrot.slane %v340, 5
        %v1086 = vsel %vm981, %v1084, %v1085
        %v1087 = vrot.slane %v341, 5
        %v1088 = vrot.slane %v1087, 4
        %v1089 = vrot.slane %v342, 5
        %v1090 = vsel %vm981, %v1088, %v1089
        %v1091 = vrot.slane %v1089, 4
        %v1092 = vrot.slane %v343, 5
        %v1093 = vsel %vm981, %v1091, %v1092
        %v1094 = vunpack.c.l.b16 %v985
        %v1095 = vunpack.c.l.b16 %v988
        %v1096 = vunpack.c.l.b16 %v992
        %v1097 = vunpack.c.l.b16 %v995
        %v1098 = vunpack.c.l.b16 %v999
        %v1099 = vunpack.c.l.b16 %v1002
        %v1100 = vunpack.c.l.b16 %v1006
        %v1101 = vunpack.c.l.b16 %v1009
        %v1102 = vunpack.c.l.b16 %v1013
        %v1103 = vunpack.c.l.b16 %v1016
        %v1104 = vunpack.c.l.b16 %v1020
        %v1105 = vunpack.c.l.b16 %v1023
        %v1106 = vunpack.c.l.b16 %v1027
        %v1107 = vunpack.c.l.b16 %v1030
        %v1108 = vunpack.c.l.b16 %v1034
        %v1109 = vunpack.c.l.b16 %v1037
        %v1110 = vunpack.c.l.b16 %v1041
        %v1111 = vunpack.c.l.b16 %v1044
        %v1112 = vunpack.c.l.b16 %v1048
        %v1113 = vunpack.c.l.b16 %v1051
        %v1114 = vunpack.c.l.b16 %v1055
        %v1115 = vunpack.c.l.b16 %v1058
        %v1116 = vunpack.c.l.b16 %v1062
        %v1117 = vunpack.c.l.b16 %v1065
        %v1118 = vunpack.c.l.b16 %v1069
        %v1119 = vunpack.c.l.b16 %v1072
        %v1120 = vunpack.c.l.b16 %v1076
        %v1121 = vunpack.c.l.b16 %v1079
        %v1122 = vunpack.c.l.b16 %v1083
        %v1123 = vunpack.c.l.b16 %v1086
        %v1124 = vunpack.c.l.b16 %v1090
        %v1125 = vunpack.c.l.b16 %v1093
        %v1126 = vpack.c.b16 %v1095, %v1094
        %v1127 = vpack.c.b16 %v1097, %v1096
        %v1128 = vpack.c.b16 %v1099, %v1098
        %v1129 = vpack.c.b16 %v1101, %v1100
        %v1130 = vpack.c.b16 %v1103, %v1102
        %v1131 = vpack.c.b16 %v1105, %v1104
        %v1132 = vpack.c.b16 %v1107, %v1106
        %v1133 = vpack.c.b16 %v1109, %v1108
        %v1134 = vpack.c.b16 %v1111, %v1110
        %v1135 = vpack.c.b16 %v1113, %v1112
        %v1136 = vpack.c.b16 %v1115, %v1114
        %v1137 = vpack.c.b16 %v1117, %v1116
        %v1138 = vpack.c.b16 %v1119, %v1118
        %v1139 = vpack.c.b16 %v1121, %v1120
        %v1140 = vpack.c.b16 %v1123, %v1122
        %v1141 = vpack.c.b16 %v1125, %v1124
        %1142 = vrot.lane.b32.xlu0 %v1126, 32
        %v1143 = vpop.permute.xlu0 %1142
        %1144 = vrot.lane.b32.xlu0 %v1127, 32
        %v1145 = vpop.permute.xlu0 %1144
        %1146 = vrot.lane.b32.xlu0 %v1128, 32
        %v1147 = vpop.permute.xlu0 %1146
        %1148 = vrot.lane.b32.xlu0 %v1129, 32
        %v1149 = vpop.permute.xlu0 %1148
        %1150 = vrot.lane.b32.xlu0 %v1130, 32
        %v1151 = vpop.permute.xlu0 %1150
        %1152 = vrot.lane.b32.xlu0 %v1131, 32
        %v1153 = vpop.permute.xlu0 %1152
        %1154 = vrot.lane.b32.xlu0 %v1132, 32
        %v1155 = vpop.permute.xlu0 %1154
        %1156 = vrot.lane.b32.xlu0 %v1133, 32
        %v1157 = vpop.permute.xlu0 %1156
        %1158 = vrot.lane.b32.xlu0 %v1134, 32
        %v1159 = vpop.permute.xlu0 %1158
        %1160 = vrot.lane.b32.xlu0 %v1135, 32
        %v1161 = vpop.permute.xlu0 %1160
        %1162 = vrot.lane.b32.xlu0 %v1136, 32
        %v1163 = vpop.permute.xlu0 %1162
        %1164 = vrot.lane.b32.xlu0 %v1137, 32
        %v1165 = vpop.permute.xlu0 %1164
        %1166 = vrot.lane.b32.xlu0 %v1138, 32
        %v1167 = vpop.permute.xlu0 %1166
        %1168 = vrot.lane.b32.xlu0 %v1139, 32
        %v1169 = vpop.permute.xlu0 %1168
        %1170 = vrot.lane.b32.xlu0 %v1140, 32
        %v1171 = vpop.permute.xlu0 %1170
        %1172 = vrot.lane.b32.xlu0 %v1141, 32
        %v1173 = vpop.permute.xlu0 %1172
        %vm1190 = vcmask 392448
        %1191 = vst.msk [vmem:[#allocation2] sm:$0xff] %vm1190, %v1143
        %1192 = vst.msk [vmem:[#allocation2 + $0x10] sm:$0xff] %vm1190, %v1145
        %1193 = vst.msk [vmem:[#allocation2 + $0x20] sm:$0xff] %vm1190, %v1147
        %1194 = vst.msk [vmem:[#allocation2 + $0x30] sm:$0xff] %vm1190, %v1149
        %1195 = vst.msk [vmem:[#allocation2 + $0x40] sm:$0xff] %vm1190, %v1151
        %1196 = vst.msk [vmem:[#allocation2 + $0x50] sm:$0xff] %vm1190, %v1153
        %1197 = vst.msk [vmem:[#allocation2 + $0x60] sm:$0xff] %vm1190, %v1155
        %1198 = vst.msk [vmem:[#allocation2 + $0x70] sm:$0xff] %vm1190, %v1157
        %1199 = vst.msk [vmem:[#allocation2 + $0x80] sm:$0xff] %vm1190, %v1159
        %1200 = vst.msk [vmem:[#allocation2 + $0x90] sm:$0xff] %vm1190, %v1161
        %1201 = vst.msk [vmem:[#allocation2 + $0xa0] sm:$0xff] %vm1190, %v1163
        %1202 = vst.msk [vmem:[#allocation2 + $0xb0] sm:$0xff] %vm1190, %v1165
        %1203 = vst.msk [vmem:[#allocation2 + $0xc0] sm:$0xff] %vm1190, %v1167
        %1204 = vst.msk [vmem:[#allocation2 + $0xd0] sm:$0xff] %vm1190, %v1169
        %1205 = vst.msk [vmem:[#allocation2 + $0xe0] sm:$0xff] %vm1190, %v1171
        %1206 = vst.msk [vmem:[#allocation2 + $0xf0] sm:$0xff] %vm1190, %v1173
        %v1209 = vunpack.c.l.b16 %v344
        %v1210 = vunpack.c.l.b16 %v345
        %v1211 = vpack.c.b16 %v1210, %v1209
        %1212 = vrot.lane.b32.xlu0 %v415, 48
        %v1213 = vpop.permute.xlu0 %1212
        %1214 = vrot.lane.b32.xlu0 %v416, 48
        %v1215 = vpop.permute.xlu0 %1214
        %1216 = vrot.lane.b32.xlu0 %v417, 48
        %v1217 = vpop.permute.xlu0 %1216
        %1218 = vrot.lane.b32.xlu0 %v418, 48
        %v1219 = vpop.permute.xlu0 %1218
        %1220 = vrot.lane.b32.xlu0 %v419, 48
        %v1221 = vpop.permute.xlu0 %1220
        %1222 = vrot.lane.b32.xlu0 %v420, 48
        %v1223 = vpop.permute.xlu0 %1222
        %1224 = vrot.lane.b32.xlu0 %v421, 48
        %v1225 = vpop.permute.xlu0 %1224
        %1226 = vrot.lane.b32.xlu0 %v422, 48
        %v1227 = vpop.permute.xlu0 %1226
        %1228 = vrot.lane.b32.xlu0 %v423, 48
        %v1229 = vpop.permute.xlu0 %1228
        %1230 = vrot.lane.b32.xlu0 %v424, 48
        %v1231 = vpop.permute.xlu0 %1230
        %1232 = vrot.lane.b32.xlu0 %v425, 48
        %v1233 = vpop.permute.xlu0 %1232
        %1234 = vrot.lane.b32.xlu0 %v426, 48
        %v1235 = vpop.permute.xlu0 %1234
        %1236 = vrot.lane.b32.xlu0 %v427, 48
        %v1237 = vpop.permute.xlu0 %1236
        %1238 = vrot.lane.b32.xlu0 %v428, 48
        %v1239 = vpop.permute.xlu0 %1238
        %1240 = vrot.lane.b32.xlu0 %v429, 48
        %v1241 = vpop.permute.xlu0 %1240
        %1242 = vrot.lane.b32.xlu0 %v1211, 48
        %v1243 = vpop.permute.xlu0 %1242
        %vm1260 = vcmask 523648
        %1261 = vst.msk [vmem:[#allocation2] sm:$0xff] %vm1260, %v1213
        %1262 = vst.msk [vmem:[#allocation2 + $0x10] sm:$0xff] %vm1260, %v1215
        %1263 = vst.msk [vmem:[#allocation2 + $0x20] sm:$0xff] %vm1260, %v1217
        %1264 = vst.msk [vmem:[#allocation2 + $0x30] sm:$0xff] %vm1260, %v1219
        %1265 = vst.msk [vmem:[#allocation2 + $0x40] sm:$0xff] %vm1260, %v1221
        %1266 = vst.msk [vmem:[#allocation2 + $0x50] sm:$0xff] %vm1260, %v1223
        %1267 = vst.msk [vmem:[#allocation2 + $0x60] sm:$0xff] %vm1260, %v1225
        %1268 = vst.msk [vmem:[#allocation2 + $0x70] sm:$0xff] %vm1260, %v1227
        %1269 = vst.msk [vmem:[#allocation2 + $0x80] sm:$0xff] %vm1260, %v1229
        %1270 = vst.msk [vmem:[#allocation2 + $0x90] sm:$0xff] %vm1260, %v1231
        %1271 = vst.msk [vmem:[#allocation2 + $0xa0] sm:$0xff] %vm1260, %v1233
        %1272 = vst.msk [vmem:[#allocation2 + $0xb0] sm:$0xff] %vm1260, %v1235
        %1273 = vst.msk [vmem:[#allocation2 + $0xc0] sm:$0xff] %vm1260, %v1237
        %1274 = vst.msk [vmem:[#allocation2 + $0xd0] sm:$0xff] %vm1260, %v1239
        %1275 = vst.msk [vmem:[#allocation2 + $0xe0] sm:$0xff] %vm1260, %v1241
        %1276 = vst.msk [vmem:[#allocation2 + $0xf0] sm:$0xff] %vm1260, %v1243
        %v1278 = vshrl.u32 %v344, 16
        %v1280 = vrot.slane %v1278, 4
        %v1281 = vshll.u32 %v344, 16
        %v1283 = vrot.slane %v1281, 5
        %v1284 = vor.u32 %v1280, %v1283
        %v1285 = vrot.slane %v1284, 4
        %v1287 = vshll.u32 %v345, 16
        %v1289 = vrot.slane %v1287, 5
        %v1290 = vsel %vm465, %v1285, %v1289
        %v1291 = vshrl.u32 %v345, 16
        %v1293 = vrot.slane %v1291, 4
        %v1294 = vor.u32 %v1293, %v1289
        %v1295 = vrot.slane %v1294, 4
        %v1297 = vshll.u32 %v346, 16
        %v1299 = vrot.slane %v1297, 5
        %v1300 = vsel %vm465, %v1295, %v1299
        %v1301 = vunpack.c.l.b16 %v1290
        %v1302 = vunpack.c.l.b16 %v1300
        %v1303 = vpack.c.b16 %v1302, %v1301
        %1304 = vrot.lane.b32.xlu0 %v883, 64
        %v1305 = vpop.permute.xlu0 %1304
        %1306 = vrot.lane.b32.xlu0 %v884, 64
        %v1307 = vpop.permute.xlu0 %1306
        %1308 = vrot.lane.b32.xlu0 %v885, 64
        %v1309 = vpop.permute.xlu0 %1308
        %1310 = vrot.lane.b32.xlu0 %v886, 64
        %v1311 = vpop.permute.xlu0 %1310
        %1312 = vrot.lane.b32.xlu0 %v887, 64
        %v1313 = vpop.permute.xlu0 %1312
        %1314 = vrot.lane.b32.xlu0 %v888, 64
        %v1315 = vpop.permute.xlu0 %1314
        %1316 = vrot.lane.b32.xlu0 %v889, 64
        %v1317 = vpop.permute.xlu0 %1316
        %1318 = vrot.lane.b32.xlu0 %v890, 64
        %v1319 = vpop.permute.xlu0 %1318
        %1320 = vrot.lane.b32.xlu0 %v891, 64
        %v1321 = vpop.permute.xlu0 %1320
        %1322 = vrot.lane.b32.xlu0 %v892, 64
        %v1323 = vpop.permute.xlu0 %1322
        %1324 = vrot.lane.b32.xlu0 %v893, 64
        %v1325 = vpop.permute.xlu0 %1324
        %1326 = vrot.lane.b32.xlu0 %v894, 64
        %v1327 = vpop.permute.xlu0 %1326
        %1328 = vrot.lane.b32.xlu0 %v895, 64
        %v1329 = vpop.permute.xlu0 %1328
        %1330 = vrot.lane.b32.xlu0 %v896, 64
        %v1331 = vpop.permute.xlu0 %1330
        %1332 = vrot.lane.b32.xlu0 %v897, 64
        %v1333 = vpop.permute.xlu0 %1332
        %1334 = vrot.lane.b32.xlu0 %v1303, 64
        %v1335 = vpop.permute.xlu0 %1334
        %vm1352 = vcmask 654848
        %1353 = vst.msk [vmem:[#allocation2] sm:$0xff] %vm1352, %v1305
        %1354 = vst.msk [vmem:[#allocation2 + $0x10] sm:$0xff] %vm1352, %v1307
        %1355 = vst.msk [vmem:[#allocation2 + $0x20] sm:$0xff] %vm1352, %v1309
        %1356 = vst.msk [vmem:[#allocation2 + $0x30] sm:$0xff] %vm1352, %v1311
        %1357 = vst.msk [vmem:[#allocation2 + $0x40] sm:$0xff] %vm1352, %v1313
        %1358 = vst.msk [vmem:[#allocation2 + $0x50] sm:$0xff] %vm1352, %v1315
        %1359 = vst.msk [vmem:[#allocation2 + $0x60] sm:$0xff] %vm1352, %v1317
        %1360 = vst.msk [vmem:[#allocation2 + $0x70] sm:$0xff] %vm1352, %v1319
        %1361 = vst.msk [vmem:[#allocation2 + $0x80] sm:$0xff] %vm1352, %v1321
        %1362 = vst.msk [vmem:[#allocation2 + $0x90] sm:$0xff] %vm1352, %v1323
        %1363 = vst.msk [vmem:[#allocation2 + $0xa0] sm:$0xff] %vm1352, %v1325
        %1364 = vst.msk [vmem:[#allocation2 + $0xb0] sm:$0xff] %vm1352, %v1327
        %1365 = vst.msk [vmem:[#allocation2 + $0xc0] sm:$0xff] %vm1352, %v1329
        %1366 = vst.msk [vmem:[#allocation2 + $0xd0] sm:$0xff] %vm1352, %v1331
        %1367 = vst.msk [vmem:[#allocation2 + $0xe0] sm:$0xff] %vm1352, %v1333
        %1368 = vst.msk [vmem:[#allocation2 + $0xf0] sm:$0xff] %vm1352, %v1335
        %v1370 = vrot.slane %v344, 5
        %v1371 = vrot.slane %v1370, 4
        %v1372 = vrot.slane %v345, 5
        %v1373 = vsel %vm981, %v1371, %v1372
        %v1374 = vrot.slane %v1372, 4
        %v1375 = vrot.slane %v346, 5
        %v1376 = vsel %vm981, %v1374, %v1375
        %v1377 = vunpack.c.l.b16 %v1373
        %v1378 = vunpack.c.l.b16 %v1376
        %v1379 = vpack.c.b16 %v1378, %v1377
        %1380 = vrot.lane.b32.xlu0 %v1127, 80
        %v1381 = vpop.permute.xlu0 %1380
        %1382 = vrot.lane.b32.xlu0 %v1128, 80
        %v1383 = vpop.permute.xlu0 %1382
        %1384 = vrot.lane.b32.xlu0 %v1129, 80
        %v1385 = vpop.permute.xlu0 %1384
        %1386 = vrot.lane.b32.xlu0 %v1130, 80
        %v1387 = vpop.permute.xlu0 %1386
        %1388 = vrot.lane.b32.xlu0 %v1131, 80
        %v1389 = vpop.permute.xlu0 %1388
        %1390 = vrot.lane.b32.xlu0 %v1132, 80
        %v1391 = vpop.permute.xlu0 %1390
        %1392 = vrot.lane.b32.xlu0 %v1133, 80
        %v1393 = vpop.permute.xlu0 %1392
        %1394 = vrot.lane.b32.xlu0 %v1134, 80
        %v1395 = vpop.permute.xlu0 %1394
        %1396 = vrot.lane.b32.xlu0 %v1135, 80
        %v1397 = vpop.permute.xlu0 %1396
        %1398 = vrot.lane.b32.xlu0 %v1136, 80
        %v1399 = vpop.permute.xlu0 %1398
        %1400 = vrot.lane.b32.xlu0 %v1137, 80
        %v1401 = vpop.permute.xlu0 %1400
        %1402 = vrot.lane.b32.xlu0 %v1138, 80
        %v1403 = vpop.permute.xlu0 %1402
        %1404 = vrot.lane.b32.xlu0 %v1139, 80
        %v1405 = vpop.permute.xlu0 %1404
        %1406 = vrot.lane.b32.xlu0 %v1140, 80
        %v1407 = vpop.permute.xlu0 %1406
        %1408 = vrot.lane.b32.xlu0 %v1141, 80
        %v1409 = vpop.permute.xlu0 %1408
        %1410 = vrot.lane.b32.xlu0 %v1379, 80
        %v1411 = vpop.permute.xlu0 %1410
        %vm1428 = vcmask 786048
        %1429 = vst.msk [vmem:[#allocation2] sm:$0xff] %vm1428, %v1381
        %1430 = vst.msk [vmem:[#allocation2 + $0x10] sm:$0xff] %vm1428, %v1383
        %1431 = vst.msk [vmem:[#allocation2 + $0x20] sm:$0xff] %vm1428, %v1385
        %1432 = vst.msk [vmem:[#allocation2 + $0x30] sm:$0xff] %vm1428, %v1387
        %1433 = vst.msk [vmem:[#allocation2 + $0x40] sm:$0xff] %vm1428, %v1389
        %1434 = vst.msk [vmem:[#allocation2 + $0x50] sm:$0xff] %vm1428, %v1391
        %1435 = vst.msk [vmem:[#allocation2 + $0x60] sm:$0xff] %vm1428, %v1393
        %1436 = vst.msk [vmem:[#allocation2 + $0x70] sm:$0xff] %vm1428, %v1395
        %1437 = vst.msk [vmem:[#allocation2 + $0x80] sm:$0xff] %vm1428, %v1397
        %1438 = vst.msk [vmem:[#allocation2 + $0x90] sm:$0xff] %vm1428, %v1399
        %1439 = vst.msk [vmem:[#allocation2 + $0xa0] sm:$0xff] %vm1428, %v1401
        %1440 = vst.msk [vmem:[#allocation2 + $0xb0] sm:$0xff] %vm1428, %v1403
        %1441 = vst.msk [vmem:[#allocation2 + $0xc0] sm:$0xff] %vm1428, %v1405
        %1442 = vst.msk [vmem:[#allocation2 + $0xd0] sm:$0xff] %vm1428, %v1407
        %1443 = vst.msk [vmem:[#allocation2 + $0xe0] sm:$0xff] %vm1428, %v1409
        %1444 = vst.msk [vmem:[#allocation2 + $0xf0] sm:$0xff] %vm1428, %v1411
        %v1447 = vunpack.c.l.b16 %v347
        %v1448 = vunpack.c.l.b16 %v348
        %v1449 = vpack.c.b16 %v1448, %v1447
        %1450 = vrot.lane.b32.xlu0 %v416, 96
        %v1451 = vpop.permute.xlu0 %1450
        %1452 = vrot.lane.b32.xlu0 %v417, 96
        %v1453 = vpop.permute.xlu0 %1452
        %1454 = vrot.lane.b32.xlu0 %v418, 96
        %v1455 = vpop.permute.xlu0 %1454
        %1456 = vrot.lane.b32.xlu0 %v419, 96
        %v1457 = vpop.permute.xlu0 %1456
        %1458 = vrot.lane.b32.xlu0 %v420, 96
        %v1459 = vpop.permute.xlu0 %1458
        %1460 = vrot.lane.b32.xlu0 %v421, 96
        %v1461 = vpop.permute.xlu0 %1460
        %1462 = vrot.lane.b32.xlu0 %v422, 96
        %v1463 = vpop.permute.xlu0 %1462
        %1464 = vrot.lane.b32.xlu0 %v423, 96
        %v1465 = vpop.permute.xlu0 %1464
        %1466 = vrot.lane.b32.xlu0 %v424, 96
        %v1467 = vpop.permute.xlu0 %1466
        %1468 = vrot.lane.b32.xlu0 %v425, 96
        %v1469 = vpop.permute.xlu0 %1468
        %1470 = vrot.lane.b32.xlu0 %v426, 96
        %v1471 = vpop.permute.xlu0 %1470
        %1472 = vrot.lane.b32.xlu0 %v427, 96
        %v1473 = vpop.permute.xlu0 %1472
        %1474 = vrot.lane.b32.xlu0 %v428, 96
        %v1475 = vpop.permute.xlu0 %1474
        %1476 = vrot.lane.b32.xlu0 %v429, 96
        %v1477 = vpop.permute.xlu0 %1476
        %1478 = vrot.lane.b32.xlu0 %v1211, 96
        %v1479 = vpop.permute.xlu0 %1478
        %1480 = vrot.lane.b32.xlu0 %v1449, 96
        %v1481 = vpop.permute.xlu0 %1480
        %vm1498 = vcmask 917248
        %1499 = vst.msk [vmem:[#allocation2] sm:$0xff] %vm1498, %v1451
        %1500 = vst.msk [vmem:[#allocation2 + $0x10] sm:$0xff] %vm1498, %v1453
        %1501 = vst.msk [vmem:[#allocation2 + $0x20] sm:$0xff] %vm1498, %v1455
        %1502 = vst.msk [vmem:[#allocation2 + $0x30] sm:$0xff] %vm1498, %v1457
        %1503 = vst.msk [vmem:[#allocation2 + $0x40] sm:$0xff] %vm1498, %v1459
        %1504 = vst.msk [vmem:[#allocation2 + $0x50] sm:$0xff] %vm1498, %v1461
        %1505 = vst.msk [vmem:[#allocation2 + $0x60] sm:$0xff] %vm1498, %v1463
        %1506 = vst.msk [vmem:[#allocation2 + $0x70] sm:$0xff] %vm1498, %v1465
        %1507 = vst.msk [vmem:[#allocation2 + $0x80] sm:$0xff] %vm1498, %v1467
        %1508 = vst.msk [vmem:[#allocation2 + $0x90] sm:$0xff] %vm1498, %v1469
        %1509 = vst.msk [vmem:[#allocation2 + $0xa0] sm:$0xff] %vm1498, %v1471
        %1510 = vst.msk [vmem:[#allocation2 + $0xb0] sm:$0xff] %vm1498, %v1473
        %1511 = vst.msk [vmem:[#allocation2 + $0xc0] sm:$0xff] %vm1498, %v1475
        %1512 = vst.msk [vmem:[#allocation2 + $0xd0] sm:$0xff] %vm1498, %v1477
        %1513 = vst.msk [vmem:[#allocation2 + $0xe0] sm:$0xff] %vm1498, %v1479
        %1514 = vst.msk [vmem:[#allocation2 + $0xf0] sm:$0xff] %vm1498, %v1481
        %v1516 = vshrl.u32 %v347, 16
        %v1518 = vrot.slane %v1516, 4
        %v1519 = vshll.u32 %v347, 16
        %v1521 = vrot.slane %v1519, 5
        %v1522 = vor.u32 %v1518, %v1521
        %v1523 = vrot.slane %v1522, 4
        %v1525 = vshll.u32 %v348, 16
        %v1527 = vrot.slane %v1525, 5
        %v1528 = vsel %vm465, %v1523, %v1527
        %v1529 = vshrl.u32 %v348, 16
        %v1531 = vrot.slane %v1529, 4
        %v1532 = vor.u32 %v1531, %v1527
        %v1533 = vrot.slane %v1532, 4
        %v1535 = vshll.u32 %v349, 16
        %v1537 = vrot.slane %v1535, 5
        %v1538 = vsel %vm465, %v1533, %v1537
        %v1539 = vunpack.c.l.b16 %v1528
        %v1540 = vunpack.c.l.b16 %v1538
        %v1541 = vpack.c.b16 %v1540, %v1539
        %1542 = vrot.lane.b32.xlu0 %v884, 112
        %v1543 = vpop.permute.xlu0 %1542
        %1544 = vrot.lane.b32.xlu0 %v885, 112
        %v1545 = vpop.permute.xlu0 %1544
        %1546 = vrot.lane.b32.xlu0 %v886, 112
        %v1547 = vpop.permute.xlu0 %1546
        %1548 = vrot.lane.b32.xlu0 %v887, 112
        %v1549 = vpop.permute.xlu0 %1548
        %1550 = vrot.lane.b32.xlu0 %v888, 112
        %v1551 = vpop.permute.xlu0 %1550
        %1552 = vrot.lane.b32.xlu0 %v889, 112
        %v1553 = vpop.permute.xlu0 %1552
        %1554 = vrot.lane.b32.xlu0 %v890, 112
        %v1555 = vpop.permute.xlu0 %1554
        %1556 = vrot.lane.b32.xlu0 %v891, 112
        %v1557 = vpop.permute.xlu0 %1556
        %1558 = vrot.lane.b32.xlu0 %v892, 112
        %v1559 = vpop.permute.xlu0 %1558
        %1560 = vrot.lane.b32.xlu0 %v893, 112
        %v1561 = vpop.permute.xlu0 %1560
        %1562 = vrot.lane.b32.xlu0 %v894, 112
        %v1563 = vpop.permute.xlu0 %1562
        %1564 = vrot.lane.b32.xlu0 %v895, 112
        %v1565 = vpop.permute.xlu0 %1564
        %1566 = vrot.lane.b32.xlu0 %v896, 112
        %v1567 = vpop.permute.xlu0 %1566
        %1568 = vrot.lane.b32.xlu0 %v897, 112
        %v1569 = vpop.permute.xlu0 %1568
        %1570 = vrot.lane.b32.xlu0 %v1303, 112
        %v1571 = vpop.permute.xlu0 %1570
        %1572 = vrot.lane.b32.xlu0 %v1541, 112
        %v1573 = vpop.permute.xlu0 %1572
        %vm1590 = vcmask 1048448
        %1591 = vst.msk [vmem:[#allocation2] sm:$0xff] %vm1590, %v1543
        %1592 = vst.msk [vmem:[#allocation2 + $0x10] sm:$0xff] %vm1590, %v1545
        %1593 = vst.msk [vmem:[#allocation2 + $0x20] sm:$0xff] %vm1590, %v1547
        %1594 = vst.msk [vmem:[#allocation2 + $0x30] sm:$0xff] %vm1590, %v1549
        %1595 = vst.msk [vmem:[#allocation2 + $0x40] sm:$0xff] %vm1590, %v1551
        %1596 = vst.msk [vmem:[#allocation2 + $0x50] sm:$0xff] %vm1590, %v1553
        %1597 = vst.msk [vmem:[#allocation2 + $0x60] sm:$0xff] %vm1590, %v1555
        %1598 = vst.msk [vmem:[#allocation2 + $0x70] sm:$0xff] %vm1590, %v1557
        %1599 = vst.msk [vmem:[#allocation2 + $0x80] sm:$0xff] %vm1590, %v1559
        %1600 = vst.msk [vmem:[#allocation2 + $0x90] sm:$0xff] %vm1590, %v1561
        %1601 = vst.msk [vmem:[#allocation2 + $0xa0] sm:$0xff] %vm1590, %v1563
        %1602 = vst.msk [vmem:[#allocation2 + $0xb0] sm:$0xff] %vm1590, %v1565
        %1603 = vst.msk [vmem:[#allocation2 + $0xc0] sm:$0xff] %vm1590, %v1567
        %1604 = vst.msk [vmem:[#allocation2 + $0xd0] sm:$0xff] %vm1590, %v1569
        %1605 = vst.msk [vmem:[#allocation2 + $0xe0] sm:$0xff] %vm1590, %v1571
        %1606 = vst.msk [vmem:[#allocation2 + $0xf0] sm:$0xff] %vm1590, %v1573
        %v1608 = vrot.slane %v347, 5
        %v1609 = vrot.slane %v1608, 4
        %v1610 = vrot.slane %v348, 5
        %v1611 = vsel %vm981, %v1609, %v1610
        %v1612 = vrot.slane %v1610, 4
        %v1613 = vrot.slane %v349, 5
        %v1614 = vsel %vm981, %v1612, %v1613
        %v1615 = vunpack.c.l.b16 %v1611
        %v1616 = vunpack.c.l.b16 %v1614
        %v1617 = vpack.c.b16 %v1616, %v1615
        %1634 = vst.msk [vmem:[#allocation2 + $0x8] sm:$0xff] %vm446, %v1128
        %1635 = vst.msk [vmem:[#allocation2 + $0x18] sm:$0xff] %vm446, %v1129
        %1636 = vst.msk [vmem:[#allocation2 + $0x28] sm:$0xff] %vm446, %v1130
        %1637 = vst.msk [vmem:[#allocation2 + $0x38] sm:$0xff] %vm446, %v1131
        %1638 = vst.msk [vmem:[#allocation2 + $0x48] sm:$0xff] %vm446, %v1132
        %1639 = vst.msk [vmem:[#allocation2 + $0x58] sm:$0xff] %vm446, %v1133
        %1640 = vst.msk [vmem:[#allocation2 + $0x68] sm:$0xff] %vm446, %v1134
        %1641 = vst.msk [vmem:[#allocation2 + $0x78] sm:$0xff] %vm446, %v1135
        %1642 = vst.msk [vmem:[#allocation2 + $0x88] sm:$0xff] %vm446, %v1136
        %1643 = vst.msk [vmem:[#allocation2 + $0x98] sm:$0xff] %vm446, %v1137
        %1644 = vst.msk [vmem:[#allocation2 + $0xa8] sm:$0xff] %vm446, %v1138
        %1645 = vst.msk [vmem:[#allocation2 + $0xb8] sm:$0xff] %vm446, %v1139
        %1646 = vst.msk [vmem:[#allocation2 + $0xc8] sm:$0xff] %vm446, %v1140
        %1647 = vst.msk [vmem:[#allocation2 + $0xd8] sm:$0xff] %vm446, %v1141
        %1648 = vst.msk [vmem:[#allocation2 + $0xe8] sm:$0xff] %vm446, %v1379
        %1649 = vst.msk [vmem:[#allocation2 + $0xf8] sm:$0xff] %vm446, %v1617
      $region40: #{conv_bn_relu_forward.1} parent=35 // pred_fallthru
        _
      %v1650 = vld [vmem:[%s267] sm:$0xff]
      %v1651 = vld [vmem:[%s267 + $0x8] sm:$0xff]
      %v1652 = vld [vmem:[%s267 + $0x10] sm:$0xff]
      %v1653 = vld [vmem:[%s267 + $0x18] sm:$0xff]
      %v1654 = vld [vmem:[#allocation2] sm:$0xff]
      %v1655 = vld [vmem:[#allocation2 + $0x8] sm:$0xff]
      %v1656 = vld [vmem:[#allocation2 + $0x10] sm:$0xff]
      %v1657 = vld [vmem:[#allocation2 + $0x18] sm:$0xff]
      %v1658 = vld [vmem:[#allocation2 + $0x20] sm:$0xff]
      %v1659 = vld [vmem:[#allocation2 + $0x28] sm:$0xff]
      %v1660 = vld [vmem:[#allocation2 + $0x30] sm:$0xff]
      %v1661 = vld [vmem:[#allocation2 + $0x38] sm:$0xff]
      %v1662 = vld [vmem:[#allocation2 + $0x40] sm:$0xff]
      %v1663 = vld [vmem:[#allocation2 + $0x48] sm:$0xff]
      %v1664 = vld [vmem:[#allocation2 + $0x50] sm:$0xff]
      %v1665 = vld [vmem:[#allocation2 + $0x58] sm:$0xff]
      %v1666 = vld [vmem:[#allocation2 + $0x60] sm:$0xff]
      %v1667 = vld [vmem:[#allocation2 + $0x68] sm:$0xff]
      %v1668 = vld [vmem:[#allocation2 + $0x70] sm:$0xff]
      %v1669 = vld [vmem:[#allocation2 + $0x78] sm:$0xff]
      %v1670 = vld [vmem:[#allocation2 + $0x80] sm:$0xff]
      %v1671 = vld [vmem:[#allocation2 + $0x88] sm:$0xff]
      %v1672 = vld [vmem:[#allocation2 + $0x90] sm:$0xff]
      %v1673 = vld [vmem:[#allocation2 + $0x98] sm:$0xff]
      %v1674 = vld [vmem:[#allocation2 + $0xa0] sm:$0xff]
      %v1675 = vld [vmem:[#allocation2 + $0xa8] sm:$0xff]
      %v1676 = vld [vmem:[#allocation2 + $0xb0] sm:$0xff]
      %v1677 = vld [vmem:[#allocation2 + $0xb8] sm:$0xff]
      %v1678 = vld [vmem:[#allocation2 + $0xc0] sm:$0xff]
      %v1679 = vld [vmem:[#allocation2 + $0xc8] sm:$0xff]
      %v1680 = vld [vmem:[#allocation2 + $0xd0] sm:$0xff]
      %v1681 = vld [vmem:[#allocation2 + $0xd8] sm:$0xff]
      %v1682 = vld [vmem:[#allocation2 + $0xe0] sm:$0xff]
      %v1683 = vld [vmem:[#allocation2 + $0xe8] sm:$0xff]
      %v1684 = vld [vmem:[#allocation2 + $0xf0] sm:$0xff]
      %v1685 = vld [vmem:[#allocation2 + $0xf8] sm:$0xff]
      %v1690 = vunpack.c.l.b16 %v1650
      %v1691 = vunpack.c.h.b16 %v1650
      %v1692 = vunpack.c.l.b16 %v1651
      %v1693 = vunpack.c.h.b16 %v1651
      %v1694 = vunpack.c.l.b16 %v1652
      %v1695 = vunpack.c.h.b16 %v1652
      %v1696 = vunpack.c.l.b16 %v1653
      %v1697 = vunpack.c.h.b16 %v1653
      %v1698 = vpack.c.b16 %v1692, %v1690
      %v1699 = vpack.c.b16 %v1693, %v1691
      %v1700 = vpack.c.b16 %v1696, %v1694
      %v1701 = vpack.c.b16 %v1697, %v1695
      %vm1704 = vcmask 130048
      %v1706 = vsel %vm1704, %v1699, 0
      %v1709 = vsel %vm1704, %v1701, 0
      %v1712 = vsel %vm1704, %v1655, 0
      %v1715 = vsel %vm1704, %v1657, 0
      %v1718 = vsel %vm1704, %v1659, 0
      %v1721 = vsel %vm1704, %v1661, 0
      %v1724 = vsel %vm1704, %v1663, 0
      %v1727 = vsel %vm1704, %v1665, 0
      %v1730 = vsel %vm1704, %v1667, 0
      %v1733 = vsel %vm1704, %v1669, 0
      %v1736 = vsel %vm1704, %v1671, 0
      %v1739 = vsel %vm1704, %v1673, 0
      %v1742 = vsel %vm1704, %v1675, 0
      %v1745 = vsel %vm1704, %v1677, 0
      %v1748 = vsel %vm1704, %v1679, 0
      %v1751 = vsel %vm1704, %v1681, 0
      %v1754 = vsel %vm1704, %v1683, 0
      %v1757 = vsel %vm1704, %v1685, 0
      %1759 = vmatprep.subr.bf16.mxu0 %v1712
      %1760 = vmatpush1.bf16.xpose.msra.mxu0 %v1654
      %1761 = vmatprep.subr.bf16.mxu0 %v1715
      %1762 = vmatpush1.bf16.xpose.msra.mxu0 %v1656
      %1763 = vmatprep.subr.bf16.mxu0 %v1718
      %1764 = vmatpush1.bf16.xpose.msra.mxu0 %v1658
      %1765 = vmatprep.subr.bf16.mxu0 %v1721
      %1766 = vmatpush1.bf16.xpose.msra.mxu0 %v1660
      %1767 = vmatprep.subr.bf16.mxu0 %v1724
      %1768 = vmatpush1.bf16.xpose.msra.mxu0 %v1662
      %1769 = vmatprep.subr.bf16.mxu0 %v1727
      %1770 = vmatpush1.bf16.xpose.msra.mxu0 %v1664
      %1771 = vmatprep.subr.bf16.mxu0 %v1730
      %1772 = vmatpush1.bf16.xpose.msra.mxu0 %v1666
      %1773 = vmatprep.subr.bf16.mxu0 %v1733
      %1774 = vmatpush1.bf16.xpose.msra.mxu0 %v1668
      %1775 = vmatprep.subr.bf16.mxu0 %v1736
      %1776 = vmatpush1.bf16.xpose.msra.mxu0 %v1670
      %1777 = vmatprep.subr.bf16.mxu0 %v1739
      %1778 = vmatpush1.bf16.xpose.msra.mxu0 %v1672
      %1779 = vmatprep.subr.bf16.mxu0 %v1742
      %1780 = vmatpush1.bf16.xpose.msra.mxu0 %v1674
      %1781 = vmatprep.subr.bf16.mxu0 %v1745
      %1782 = vmatpush1.bf16.xpose.msra.mxu0 %v1676
      %1783 = vmatprep.subr.bf16.mxu0 %v1748
      %1784 = vmatpush1.bf16.xpose.msra.mxu0 %v1678
      %1785 = vmatprep.subr.bf16.mxu0 %v1751
      %1786 = vmatpush1.bf16.xpose.msra.mxu0 %v1680
      %1787 = vmatprep.subr.bf16.mxu0 %v1754
      %1788 = vmatpush1.bf16.xpose.msra.mxu0 %v1682
      %1789 = vmatprep.subr.bf16.mxu0 %v1757
      %1790 = vmatpush1.bf16.xpose.msra.mxu0 %v1684
      %1791 = vmatprep.mubr.bf16.mxu0 %v1706
      %1792 = vmatmul.mubr.bf16.gmra.mrb[0].mxu0 %v1698
      %v1793 = vpop.f32.mrb[0].mxu0
      %v1794 = vadd.f32 0.0, %v1793
      %v1795 = vpop.f32.mrb[0].mxu0
      %v1796 = vadd.f32 0.0, %v1795
      %v1797 = vpop.f32.mrb[0].mxu0
      %v1798 = vadd.f32 0.0, %v1797
      %v1799 = vpop.f32.mrb[0].mxu0
      %v1800 = vadd.f32 0.0, %v1799
      %1801 = vmatprep.mubr.bf16.mxu0 %v1709
      %1802 = vmatmul.mubr.bf16.gmra.mrb[0].mxu0 %v1700
      %v1803 = vpop.f32.mrb[0].mxu0
      %v1804 = vadd.f32 0.0, %v1803
      %v1805 = vpop.f32.mrb[0].mxu0
      %v1806 = vadd.f32 0.0, %v1805
      %v1807 = vpop.f32.mrb[0].mxu0
      %v1808 = vadd.f32 0.0, %v1807
      %v1809 = vpop.f32.mrb[0].mxu0
      %v1810 = vadd.f32 0.0, %v1809
      %1811 = vdwg.mxu0
      %v1812 = vld [vmem:[%s273] sm:$0xff]
      %v1813 = vld [vmem:[%s273 + $0x8] sm:$0xff]
      %v1814 = vld [vmem:[%s273 + $0x10] sm:$0xff]
      %v1815 = vld [vmem:[%s273 + $0x18] sm:$0xff]
      %1817 = vset.pattern.permute.xlu0 0
      %1818 = vperm.xlu0 %1817, %v1812
      %v1819 = vpop.permute.xlu0 %1818
      %1822 = vset.pattern.permute.xlu0 0
      %1823 = vperm.xlu0 %1822, %v1813
      %v1824 = vpop.permute.xlu0 %1823
      %1827 = vset.pattern.permute.xlu0 0
      %1828 = vperm.xlu0 %1827, %v1814
      %v1829 = vpop.permute.xlu0 %1828
      %1832 = vset.pattern.permute.xlu0 0
      %1833 = vperm.xlu0 %1832, %v1815
      %v1834 = vpop.permute.xlu0 %1833
      %v1836 = vmul.f32 %v1794, %v1819
      %v1837 = vmul.f32 %v1796, %v1819
      %v1838 = vmul.f32 %v1798, %v1824
      %v1839 = vmul.f32 %v1800, %v1824
      %v1840 = vmul.f32 %v1804, %v1829
      %v1841 = vmul.f32 %v1806, %v1829
      %v1842 = vmul.f32 %v1808, %v1834
      %v1843 = vmul.f32 %v1810, %v1834
      %v1844 = vld [vmem:[%s279] sm:$0xff]
      %v1845 = vld [vmem:[%s279 + $0x8] sm:$0xff]
      %v1846 = vld [vmem:[%s279 + $0x10] sm:$0xff]
      %v1847 = vld [vmem:[%s279 + $0x18] sm:$0xff]
      %1849 = vset.pattern.permute.xlu0 0
      %1850 = vperm.xlu0 %1849, %v1844
      %v1851 = vpop.permute.xlu0 %1850
      %1854 = vset.pattern.permute.xlu0 0
      %1855 = vperm.xlu0 %1854, %v1845
      %v1856 = vpop.permute.xlu0 %1855
      %1859 = vset.pattern.permute.xlu0 0
      %1860 = vperm.xlu0 %1859, %v1846
      %v1861 = vpop.permute.xlu0 %1860
      %1864 = vset.pattern.permute.xlu0 0
      %1865 = vperm.xlu0 %1864, %v1847
      %v1866 = vpop.permute.xlu0 %1865
      %v1868 = vadd.f32 %v1836, %v1851
      %v1869 = vadd.f32 %v1837, %v1851
      %v1870 = vadd.f32 %v1838, %v1856
      %v1871 = vadd.f32 %v1839, %v1856
      %v1872 = vadd.f32 %v1840, %v1861
      %v1873 = vadd.f32 %v1841, %v1861
      %v1874 = vadd.f32 %v1842, %v1866
      %v1875 = vadd.f32 %v1843, %v1866
      %v1876 = vmax.f32 %v1868, 0.0
      %v1877 = vmax.f32 %v1869, 0.0
      %v1878 = vmax.f32 %v1870, 0.0
      %v1879 = vmax.f32 %v1871, 0.0
      %v1880 = vmax.f32 %v1872, 0.0
      %v1881 = vmax.f32 %v1873, 0.0
      %v1882 = vmax.f32 %v1874, 0.0
      %v1883 = vmax.f32 %v1875, 0.0
      %1884 = vst [vmem:[%s290] sm:$0xff] %v1876
      %1885 = vst [vmem:[%s290 + $0x8] sm:$0xff] %v1877
      %1886 = vst [vmem:[%s290 + $0x10] sm:$0xff] %v1878
      %1887 = vst [vmem:[%s290 + $0x18] sm:$0xff] %v1879
      %1888 = vst [vmem:[%s290 + $0x20] sm:$0xff] %v1880
      %1889 = vst [vmem:[%s290 + $0x28] sm:$0xff] %v1881
      %1890 = vst [vmem:[%s290 + $0x30] sm:$0xff] %v1882
      %1891 = vst [vmem:[%s290 + $0x38] sm:$0xff] %v1883
      %s1892 = smul.u32 4, %s20
      %p1893 = scmp.lt.s32.totalorder %s19, 1
      %s1894 = scalar_select %p1893, %s19, 1
      %p1895 = scmp.lt.s32.totalorder %s1892, 3
      %s1896 = scalar_select %p1895, %s1892, 3
      %s1897 = smul.addr %s1896, 2
      %s1898 = smul.addr %s1894, 8
      %s1899 = sadd.s32 %s1897, %s1898
      %s1900 = smul.addr %s1899, 8
      %s1901 = scalar_lea.vmem %s4, %s1900
      // Predicated region
      $region41: #{conv_bn_relu_forward.1} parent=35 // pred_check
        %p1902 = pneg %p151
      $region42: #{conv_bn_relu_forward.1} parent=35 // pred_check_branch
        %1904 = sbr.rel (%p1902) target = $region44
      $region43: #{conv_bn_relu_forward.1} parent=35 // pred_region
        %s1905 = smul.u32 4, %s20
      $region44: #{conv_bn_relu_forward.1} parent=35 // pred_fallthru
        _
    $region36: #{conv_bn_relu_forward.1} parent=5 // pred_fallthru
      _
    %p1906 = scmp.le.s32.totalorder 2, %s10
    // Predicated region
    $region45: #{conv_bn_relu_forward.1} parent=5 // pred_check
      %p1907 = pneg %p1906
    $region46: #{conv_bn_relu_forward.1} parent=5 // pred_check_branch
      %1909 = sbr.rel (%p1907) target = $region48
    $region47: #{conv_bn_relu_forward.1} parent=5 // pred_region
      %s1910 = ssub.s32 %s10, 2
      // Predicated region
      $region49: #{conv_bn_relu_forward.1} parent=47 // pred_check
        %p1911 = pneg %p157
      $region50: #{conv_bn_relu_forward.1} parent=47 // pred_check_branch
        %1913 = sbr.rel (%p1911) target = $region52
      $region51: #{conv_bn_relu_forward.1} parent=47 // pred_region
        %s1914 = smul.u32 4, %s22
        %p1915 = scmp.lt.s32.totalorder %s21, 1
        %s1916 = scalar_select %p1915, %s21, 1
        %p1917 = scmp.lt.s32.totalorder %s1914, 3
        %s1918 = scalar_select %p1917, %s1914, 3
        %s1919 = smul.addr %s1918, 2
        %s1920 = smul.addr %s1916, 8
        %s1921 = sadd.s32 %s1919, %s1920
        %s1922 = smul.addr %s1921, 8
        %s1923 = scalar_lea.vmem %s4, %s1922
      $region52: #{conv_bn_relu_forward.1} parent=47 // pred_fallthru
        _
    $region48: #{conv_bn_relu_forward.1} parent=5 // pred_fallthru
      _
  $region6: #{conv_bn_relu_forward.1} parent=0 // loop_footer
    %s14 = sadd.s32 1, %s10
  $region7: #{conv_bn_relu_forward.1} parent=0 // loop_footer_branch
    %9 = sbr.rel target = $region3
  $region8: #{conv_bn_relu_forward.1} parent=0 // loop_exit
    _

</llo_original>
